<compile_context>
chip_gen: v6e
topology: v6e:2x2x1
jax: 0.10.0
libtpu: 0.0.40
codegen_flags: <defaults>
</compile_context>

<pallas_src>
import functools

import jax
import jax.numpy as jnp
from jax.experimental import pallas as pl
from jax.experimental.pallas import tpu as pltpu


def _round_up(x, m):
    return ((x + m - 1) // m) * m


def _sae_forward_kernel(normalize, n_enc, n_dec, mxu_dtype, act_dtype,
                        approx_recip, x_ref, *refs):
    """refs = [W0, b0, W1, b1, ... (encoder then decoder)], latents_ref, recons_ref."""
    n_params = 2 * (n_enc + n_dec)
    w_refs = refs[:n_params]
    latents_ref = refs[n_params]
    recons_ref = refs[n_params + 1]

    # x may be DMA'd as bf16; LN statistics are always computed in f32.
    x = x_ref[...].astype(jnp.float32)

    if normalize:
        # LN() from the reference: mean over last dim, UNBIASED std (torch.std
        # default ddof=1), eps added to std (not variance).
        n_feat = x.shape[-1]
        mu = jnp.mean(x, axis=-1, keepdims=True)
        xc = x - mu
        var = jnp.sum(xc * xc, axis=-1, keepdims=True) / max(n_feat - 1, 1)
        std = jnp.sqrt(var)
        inv = pl.reciprocal(std + 1e-5, approx=approx_recip)   # EUP slot
        h = (xc * inv).astype(act_dtype)
        del x, xc, var, inv   # only (TM, 1) mu/std stay live across both MLPs
    else:
        mu = None
        std = None
        h = x.astype(act_dtype)

    # Encoder: Linear, then (ReLU, Linear) * (n_enc - 1).
    # MXU operands in mxu_dtype, f32 accumulation; bias-add in f32; inter-layer
    # activations kept in act_dtype (bf16 halves vreg/VMEM pressure).
    for li in range(n_enc):
        if li > 0:
            h = jnp.maximum(h, 0.0)
        w = w_refs[2 * li][...]
        b = w_refs[2 * li + 1][...].astype(jnp.float32)
        h = jnp.dot(h.astype(mxu_dtype), w,
                    preferred_element_type=jnp.float32) + b
        if li < n_enc - 1:
            h = h.astype(act_dtype)
    latents_ref[...] = h.astype(latents_ref.dtype)

    # Decoder: Linear, then (ReLU, Linear) * (n_dec - 1).
    d = h.astype(act_dtype)
    for li in range(n_dec):
        if li > 0:
            d = jnp.maximum(d, 0.0)
        w = w_refs[2 * (n_enc + li)][...]
        b = w_refs[2 * (n_enc + li) + 1][...].astype(jnp.float32)
        d = jnp.dot(d.astype(mxu_dtype), w,
                    preferred_element_type=jnp.float32) + b
        if li < n_dec - 1:
            d = d.astype(act_dtype)

    if normalize:
        d = d * std + mu        # de-norm in f32
    recons_ref[...] = d.astype(recons_ref.dtype)


def prepare_params(enc_params, dec_params, param_dtype=jnp.bfloat16):
    """Pre-cast weights/biases ONCE (avoids a weight-sized HBM round trip per
    forward call) and reshape biases to 2-D for clean VMEM tiles."""
    def conv(params):
        out = []
        for (w, b) in params:
            out.append((jnp.asarray(w, dtype=param_dtype),
                        jnp.asarray(b, dtype=param_dtype).reshape(1, -1)))
        return out
    return conv(enc_params), conv(dec_params)


def naive_autoencoder_forward(x, enc_params, dec_params, *, normalize,
                              dataset_level_norm=False, data_mean=None,
                              tm=512, mxu_dtype=jnp.bfloat16,
                              act_dtype=None, latents_dtype=jnp.float32,
                              x_dtype=jnp.float32, approx_recip=True):
    """Returns (None, latents, recons), matching NaiveAutoEncoder.forward.

    Use approx_recip=False and mxu_dtype=f32 for bit-tight f32 configs.
    """
    if act_dtype is None:
        act_dtype = mxu_dtype

    x = x.astype(jnp.float32)                       # matches x.float()
    if dataset_level_norm:
        # NOTE: matches PyTorch — recons stays in mean-subtracted space.
        x = x - data_mean
    if jnp.dtype(x_dtype) != x.dtype:
        x = x.astype(x_dtype)                       # optional bf16 DMA of x

    batch, n_inputs = x.shape
    n_enc = len(enc_params)
    n_dec = len(dec_params)
    n_latents = enc_params[-1][0].shape[1]
    n_out = dec_params[-1][0].shape[1]

    # --- batch tiling --------------------------------------------------------
    # Big tiles amortize per-grid-step overhead; also guarantee >= 2 grid steps
    # when the batch allows it so v7x's second TensorCore gets work.
    sub = 16 if min(jnp.dtype(x_dtype).itemsize,
                    jnp.dtype(latents_dtype).itemsize) < 4 else 8
    rb = _round_up(batch, sub)
    tm = max(sub, min(_round_up(int(tm), sub), rb))
    if rb >= 2 * sub and tm > rb // 2:
        tm = max(sub, (rb // 2) // sub * sub)
    padded_batch = _round_up(batch, tm)
    if padded_batch != batch:
        x = jnp.pad(x, ((0, padded_batch - batch), (0, 0)))
    grid = (padded_batch // tm,)

    # --- operands + BlockSpecs ----------------------------------------------
    resident = pl.Buffered(1)   # constant index_map -> single VMEM buffer
    flat = [x]
    in_specs = [pl.BlockSpec((tm, n_inputs), lambda i: (i, 0))]
    for (w, b) in list(enc_params) + list(dec_params):
        if w.dtype != jnp.dtype(mxu_dtype):
            w = w.astype(mxu_dtype)                 # no-op if pre-cast outside
        b2 = b.reshape(1, -1)
        if b2.dtype != jnp.dtype(mxu_dtype):
            b2 = b2.astype(mxu_dtype)
        flat.append(w)
        in_specs.append(pl.BlockSpec(w.shape, lambda i: (0, 0),
                                     pipeline_mode=resident))
        flat.append(b2)
        in_specs.append(pl.BlockSpec(b2.shape, lambda i: (0, 0),
                                     pipeline_mode=resident))

    out_specs = (
        pl.BlockSpec((tm, n_latents), lambda i: (i, 0)),
        pl.BlockSpec((tm, n_out), lambda i: (i, 0)),
    )
    out_shapes = (
        jax.ShapeDtypeStruct((padded_batch, n_latents), latents_dtype),
        jax.ShapeDtypeStruct((padded_batch, n_out), jnp.float32),
    )

    # --- VMEM budget, per chip generation ------------------------------------
    bytes_params = sum(int(a.size) * a.dtype.itemsize for a in flat[1:])  # 1x (single-buffered)
    lat_isz = jnp.dtype(latents_dtype).itemsize
    x_isz = jnp.dtype(x.dtype).itemsize
    bytes_io_tiles = 2 * tm * (x_isz * n_inputs + lat_isz * n_latents + 4 * n_out)
    widest = max(n_inputs, n_latents, n_out)
    bytes_live = 4 * 4 * tm * widest                # f32 temps headroom
    est = bytes_params + bytes_io_tiles + bytes_live

    try:
        vmem_cap = int(pltpu.get_tpu_info().vmem_capacity_bytes)
    except Exception:
        vmem_cap = 64 * 1024 * 1024                 # safe on every generation
    if vmem_cap <= 64 * 1024 * 1024:
        # v7x-class: leave headroom for Mosaic internal scratch / semaphores.
        cap = vmem_cap - 8 * 1024 * 1024
    else:
        # v5e/v6e: 128 MiB physical -> allow up to ~110 MiB.
        cap = min(vmem_cap - 16 * 1024 * 1024, 110 * 1024 * 1024)
    vmem_limit = int(min(max(est + est // 2, 32 * 1024 * 1024), cap))

    kernel = functools.partial(_sae_forward_kernel, normalize, n_enc, n_dec,
                               mxu_dtype, act_dtype, approx_recip)
    latents, recons = pl.pallas_call(
        kernel,
        grid=grid,
        in_specs=in_specs,
        out_specs=out_specs,
        out_shape=out_shapes,
        compiler_params=pltpu.CompilerParams(
            dimension_semantics=("parallel",),   # megacore-shard batch tiles
            vmem_limit_bytes=vmem_limit,
        ),
    )(*flat)

    if padded_batch != batch:
        latents = latents[:batch]
        recons = recons[:batch]
    return None, latents, recons


def _init_linear(key, fan_in, fan_out):
    """Deterministic init matching torch.nn.Linear default shapes/ranges.

    Returns W already transposed to [in, out] plus bias [out]."""
    kw, kb = jax.random.split(key)
    bound = 1.0 / jnp.sqrt(jnp.float32(fan_in))
    w = jax.random.uniform(kw, (fan_in, fan_out), jnp.float32, -bound, bound)
    b = jax.random.uniform(kb, (fan_out,), jnp.float32, -bound, bound)
    return w, b


def build_params(key, n_latents, n_inputs, layer_num):
    """Mirror NaiveEncoder / NaiveDecoder constructor layer shapes."""
    enc_shapes = [(n_inputs, n_latents)] + [(n_latents, n_latents)] * (layer_num - 1)
    dec_shapes = [(n_latents, n_latents)] + [(n_latents, n_latents)] * max(layer_num - 2, 0)
    if layer_num > 1:
        dec_shapes.append((n_latents, n_inputs))

    keys = jax.random.split(key, len(enc_shapes) + len(dec_shapes))
    enc_params, dec_params = [], []
    ki = 0
    for fin, fout in enc_shapes:
        enc_params.append(_init_linear(keys[ki], fin, fout)); ki += 1
    for fin, fout in dec_shapes:
        dec_params.append(_init_linear(keys[ki], fin, fout)); ki += 1
    return enc_params, dec_params


def _reference_forward(x, enc_params, dec_params, normalize):
    """Pure-JAX f32 reference of the PyTorch forward, for correctness checks."""
    x = x.astype(jnp.float32)
    if normalize:
        mu = jnp.mean(x, axis=-1, keepdims=True)
        xc = x - mu
        std = jnp.sqrt(jnp.sum(xc * xc, axis=-1, keepdims=True) / (x.shape[-1] - 1))
        h = xc / (std + 1e-5)
    else:
        h = x
    for li, (w, b) in enumerate(enc_params):
        if li > 0:
            h = jnp.maximum(h, 0.0)
        h = h @ w + b
    latents = h
    d = h
    for li, (w, b) in enumerate(dec_params):
        if li > 0:
            d = jnp.maximum(d, 0.0)
        d = d @ w + b
    if normalize:
        d = d * std + mu
    return latents, d


if __name__ == "__main__":
    key = jax.random.PRNGKey(0)
    k_x, k_p = jax.random.split(key)

    # Small but lane/MXU-friendly shapes (128-aligned feature dims).
    batch, n_inputs, n_latents, layer_num = 256, 256, 128, 2
    normalize = True  # exercise the LN preprocess / de-norm path

    x = jax.random.normal(k_x, (batch, n_inputs), jnp.float32)
    enc_params, dec_params = build_params(k_p, n_latents, n_inputs, layer_num)
    ref_lat, ref_rec = _reference_forward(x, enc_params, dec_params, normalize)

    # 1) Tight correctness check: f32 operands everywhere + exact reciprocal.
    _, lat_f32, rec_f32 = naive_autoencoder_forward(
        x, enc_params, dec_params, normalize=normalize,
        tm=128, mxu_dtype=jnp.float32, approx_recip=False)
    jax.block_until_ready((lat_f32, rec_f32))
    assert jnp.allclose(lat_f32, ref_lat, atol=1e-4, rtol=1e-4)
    assert jnp.allclose(rec_f32, ref_rec, atol=1e-4, rtol=1e-4)

    # 2) Performance config: pre-cast bf16 params (one-time), bf16 x DMA,
    #    bf16 inter-layer activations, bf16 latents output, approx reciprocal.
    enc_bf, dec_bf = prepare_params(enc_params, dec_params, jnp.bfloat16)
    none_out, lat_bf, rec_bf = naive_autoencoder_forward(
        x, enc_bf, dec_bf, normalize=normalize,
        tm=512, mxu_dtype=jnp.bfloat16, latents_dtype=jnp.bfloat16,
        x_dtype=jnp.bfloat16, approx_recip=True)
    jax.block_until_ready((lat_bf, rec_bf))
    assert none_out is None
    assert lat_bf.dtype == jnp.bfloat16
    assert jnp.allclose(lat_bf.astype(jnp.float32), ref_lat, atol=5e-2, rtol=5e-2)
    assert jnp.allclose(rec_bf, ref_rec, atol=5e-2, rtol=5e-2)

    # 3) Tail-batch path: batch not a multiple of the tile -> padded + sliced.
    _, lat_t, rec_t = naive_autoencoder_forward(
        x[:100], enc_params, dec_params, normalize=normalize,
        tm=64, mxu_dtype=jnp.float32, approx_recip=False)
    jax.block_until_ready((lat_t, rec_t))
    assert lat_t.shape == (100, n_latents) and rec_t.shape == (100, n_inputs)
    assert jnp.allclose(lat_t, ref_lat[:100], atol=1e-4, rtol=1e-4)
    assert jnp.allclose(rec_t, ref_rec[:100], atol=1e-4, rtol=1e-4)

    print("KERNEL_OK")
</pallas_src>

<mosaic_0001>
module attributes {stable_mosaic.version = 11 : i64} {
  func.func @_sae_forward_kernel(%arg0: i32, %arg1: memref<128x256xf32, #tpu.memory_space<vmem>>, %arg2: memref<256x128xf32, #tpu.memory_space<vmem>>, %arg3: memref<1x128xf32, #tpu.memory_space<vmem>>, %arg4: memref<128x128xf32, #tpu.memory_space<vmem>>, %arg5: memref<1x128xf32, #tpu.memory_space<vmem>>, %arg6: memref<128x128xf32, #tpu.memory_space<vmem>>, %arg7: memref<1x128xf32, #tpu.memory_space<vmem>>, %arg8: memref<128x256xf32, #tpu.memory_space<vmem>>, %arg9: memref<1x256xf32, #tpu.memory_space<vmem>>, %arg10: memref<128x128xf32, #tpu.memory_space<vmem>>, %arg11: memref<128x256xf32, #tpu.memory_space<vmem>>) attributes {dimension_semantics = [#tpu.dimension_semantics<parallel>], iteration_bounds = array<i64: 2>, scalar_prefetch = 0 : i64, scratch_operands = 0 : i64, tpu.core_type = #tpu.core_type<tc>, window_params = [{transform_indices = @transform_0, window_bounds = array<i64: 128, 256>}, {pipeline_mode = #tpu.pipeline_mode<synchronous>, transform_indices = @transform_1, window_bounds = array<i64: 256, 128>}, {pipeline_mode = #tpu.pipeline_mode<synchronous>, transform_indices = @transform_2, window_bounds = array<i64: 1, 128>}, {pipeline_mode = #tpu.pipeline_mode<synchronous>, transform_indices = @transform_3, window_bounds = array<i64: 128, 128>}, {pipeline_mode = #tpu.pipeline_mode<synchronous>, transform_indices = @transform_4, window_bounds = array<i64: 1, 128>}, {pipeline_mode = #tpu.pipeline_mode<synchronous>, transform_indices = @transform_5, window_bounds = array<i64: 128, 128>}, {pipeline_mode = #tpu.pipeline_mode<synchronous>, transform_indices = @transform_6, window_bounds = array<i64: 1, 128>}, {pipeline_mode = #tpu.pipeline_mode<synchronous>, transform_indices = @transform_7, window_bounds = array<i64: 128, 256>}, {pipeline_mode = #tpu.pipeline_mode<synchronous>, transform_indices = @transform_8, window_bounds = array<i64: 1, 256>}, {transform_indices = @transform_9, window_bounds = array<i64: 128, 128>}, {transform_indices = @transform_10, window_bounds = array<i64: 128, 256>}]} {
    %c0 = arith.constant 0 : index
    %c0_0 = arith.constant 0 : index
    %0 = vector.load %arg1[%c0, %c0_0] : memref<128x256xf32, #tpu.memory_space<vmem>>, vector<128x256xf32>
    %cst = arith.constant dense<0.000000e+00> : vector<128xf32>
    %1 = vector.multi_reduction <add>, %0, %cst [1] : vector<128x256xf32> to vector<128xf32>
    %2 = vector.shape_cast %1 : vector<128xf32> to vector<128x1xf32>
    %cst_1 = arith.constant 2.560000e+02 : f32
    %3 = vector.broadcast %cst_1 : f32 to vector<128x1xf32>
    %4 = arith.divf %2, %3 : vector<128x1xf32>
    %5 = vector.broadcast %4 : vector<128x1xf32> to vector<128x256xf32>
    %6 = arith.subf %0, %5 : vector<128x256xf32>
    %7 = arith.mulf %6, %6 : vector<128x256xf32>
    %cst_2 = arith.constant dense<0.000000e+00> : vector<128xf32>
    %8 = vector.multi_reduction <add>, %7, %cst_2 [1] : vector<128x256xf32> to vector<128xf32>
    %9 = vector.shape_cast %8 : vector<128xf32> to vector<128x1xf32>
    %cst_3 = arith.constant 2.550000e+02 : f32
    %10 = vector.broadcast %cst_3 : f32 to vector<128x1xf32>
    %11 = arith.divf %9, %10 : vector<128x1xf32>
    %12 = math.sqrt %11 : vector<128x1xf32>
    %cst_4 = arith.constant 9.99999974E-6 : f32
    %13 = vector.broadcast %cst_4 : f32 to vector<128x1xf32>
    %14 = arith.addf %12, %13 : vector<128x1xf32>
    %15 = tpu.reciprocal %14 : vector<128x1xf32> -> vector<128x1xf32>
    %16 = vector.broadcast %15 : vector<128x1xf32> to vector<128x256xf32>
    %17 = arith.mulf %6, %16 : vector<128x256xf32>
    %c0_5 = arith.constant 0 : index
    %c0_6 = arith.constant 0 : index
    %18 = vector.load %arg2[%c0_5, %c0_6] : memref<256x128xf32, #tpu.memory_space<vmem>>, vector<256x128xf32>
    %c0_7 = arith.constant 0 : index
    %c0_8 = arith.constant 0 : index
    %19 = vector.load %arg3[%c0_7, %c0_8] : memref<1x128xf32, #tpu.memory_space<vmem>>, vector<1x128xf32>
    %cst_9 = arith.constant dense<0.000000e+00> : vector<128x128xf32>
    %20 = tpu.matmul %17, %18, %cst_9 {dimension_numbers = #tpu.dot_dimension_numbers<[1], [0], [0], [1], [0, 0, 1, 1], [], []>} : vector<128x256xf32>, vector<256x128xf32>, vector<128x128xf32> -> vector<128x128xf32>
    %21 = vector.broadcast %19 : vector<1x128xf32> to vector<128x128xf32>
    %22 = arith.addf %20, %21 : vector<128x128xf32>
    %cst_10 = arith.constant 0.000000e+00 : f32
    %23 = vector.broadcast %cst_10 : f32 to vector<128x128xf32>
    %24 = arith.maximumf %22, %23 : vector<128x128xf32>
    %c0_11 = arith.constant 0 : index
    %c0_12 = arith.constant 0 : index
    %25 = vector.load %arg4[%c0_11, %c0_12] : memref<128x128xf32, #tpu.memory_space<vmem>>, vector<128x128xf32>
    %c0_13 = arith.constant 0 : index
    %c0_14 = arith.constant 0 : index
    %26 = vector.load %arg5[%c0_13, %c0_14] : memref<1x128xf32, #tpu.memory_space<vmem>>, vector<1x128xf32>
    %cst_15 = arith.constant dense<0.000000e+00> : vector<128x128xf32>
    %27 = tpu.matmul %24, %25, %cst_15 {dimension_numbers = #tpu.dot_dimension_numbers<[1], [0], [0], [1], [0, 0, 1, 1], [], []>} : vector<128x128xf32>, vector<128x128xf32>, vector<128x128xf32> -> vector<128x128xf32>
    %28 = vector.broadcast %26 : vector<1x128xf32> to vector<128x128xf32>
    %29 = arith.addf %27, %28 : vector<128x128xf32>
    %c0_16 = arith.constant 0 : index
    %c0_17 = arith.constant 0 : index
    %30 = vector.load %arg10[%c0_16, %c0_17] : memref<128x128xf32, #tpu.memory_space<vmem>>, vector<128x128xf32>
    tpu.vector_store %arg10[%c0_16, %c0_17], %29 {strides = array<i32>} : memref<128x128xf32, #tpu.memory_space<vmem>>, vector<128x128xf32>,
    %c0_18 = arith.constant 0 : index
    %c0_19 = arith.constant 0 : index
    %31 = vector.load %arg6[%c0_18, %c0_19] : memref<128x128xf32, #tpu.memory_space<vmem>>, vector<128x128xf32>
    %c0_20 = arith.constant 0 : index
    %c0_21 = arith.constant 0 : index
    %32 = vector.load %arg7[%c0_20, %c0_21] : memref<1x128xf32, #tpu.memory_space<vmem>>, vector<1x128xf32>
    %cst_22 = arith.constant dense<0.000000e+00> : vector<128x128xf32>
    %33 = tpu.matmul %29, %31, %cst_22 {dimension_numbers = #tpu.dot_dimension_numbers<[1], [0], [0], [1], [0, 0, 1, 1], [], []>} : vector<128x128xf32>, vector<128x128xf32>, vector<128x128xf32> -> vector<128x128xf32>
    %34 = vector.broadcast %32 : vector<1x128xf32> to vector<128x128xf32>
    %35 = arith.addf %33, %34 : vector<128x128xf32>
    %cst_23 = arith.constant 0.000000e+00 : f32
    %36 = vector.broadcast %cst_23 : f32 to vector<128x128xf32>
    %37 = arith.maximumf %35, %36 : vector<128x128xf32>
    %c0_24 = arith.constant 0 : index
    %c0_25 = arith.constant 0 : index
    %38 = vector.load %arg8[%c0_24, %c0_25] : memref<128x256xf32, #tpu.memory_space<vmem>>, vector<128x256xf32>
    %c0_26 = arith.constant 0 : index
    %c0_27 = arith.constant 0 : index
    %39 = vector.load %arg9[%c0_26, %c0_27] : memref<1x256xf32, #tpu.memory_space<vmem>>, vector<1x256xf32>
    %cst_28 = arith.constant dense<0.000000e+00> : vector<128x256xf32>
    %40 = tpu.matmul %37, %38, %cst_28 {dimension_numbers = #tpu.dot_dimension_numbers<[1], [0], [0], [1], [0, 0, 1, 1], [], []>} : vector<128x128xf32>, vector<128x256xf32>, vector<128x256xf32> -> vector<128x256xf32>
    %41 = vector.broadcast %39 : vector<1x256xf32> to vector<128x256xf32>
    %42 = arith.addf %40, %41 : vector<128x256xf32>
    %43 = vector.broadcast %12 : vector<128x1xf32> to vector<128x256xf32>
    %44 = arith.mulf %42, %43 : vector<128x256xf32>
    %45 = vector.broadcast %4 : vector<128x1xf32> to vector<128x256xf32>
    %46 = arith.addf %44, %45 : vector<128x256xf32>
    %c0_29 = arith.constant 0 : index
    %c0_30 = arith.constant 0 : index
    %47 = vector.load %arg11[%c0_29, %c0_30] : memref<128x256xf32, #tpu.memory_space<vmem>>, vector<128x256xf32>
    tpu.vector_store %arg11[%c0_29, %c0_30], %46 {strides = array<i32>} : memref<128x256xf32, #tpu.memory_space<vmem>>, vector<128x256xf32>,
    return
  }
  func.func @transform_0(%arg0: i32) -> (i32, i32) {
    %c0_i32 = arith.constant 0 : i32
    %c0_i32_0 = arith.constant 0 : i32
    return %arg0, %c0_i32 : i32, i32
  }
  func.func @transform_1(%arg0: i32) -> (i32, i32) {
    %c0_i32 = arith.constant 0 : i32
    %c0_i32_0 = arith.constant 0 : i32
    %c0_i32_1 = arith.constant 0 : i32
    return %c0_i32, %c0_i32_0 : i32, i32
  }
  func.func @transform_2(%arg0: i32) -> (i32, i32) {
    %c0_i32 = arith.constant 0 : i32
    %c0_i32_0 = arith.constant 0 : i32
    %c0_i32_1 = arith.constant 0 : i32
    return %c0_i32, %c0_i32_0 : i32, i32
  }
  func.func @transform_3(%arg0: i32) -> (i32, i32) {
    %c0_i32 = arith.constant 0 : i32
    %c0_i32_0 = arith.constant 0 : i32
    %c0_i32_1 = arith.constant 0 : i32
    return %c0_i32, %c0_i32_0 : i32, i32
  }
  func.func @transform_4(%arg0: i32) -> (i32, i32) {
    %c0_i32 = arith.constant 0 : i32
    %c0_i32_0 = arith.constant 0 : i32
    %c0_i32_1 = arith.constant 0 : i32
    return %c0_i32, %c0_i32_0 : i32, i32
  }
  func.func @transform_5(%arg0: i32) -> (i32, i32) {
    %c0_i32 = arith.constant 0 : i32
    %c0_i32_0 = arith.constant 0 : i32
    %c0_i32_1 = arith.constant 0 : i32
    return %c0_i32, %c0_i32_0 : i32, i32
  }
  func.func @transform_6(%arg0: i32) -> (i32, i32) {
    %c0_i32 = arith.constant 0 : i32
    %c0_i32_0 = arith.constant 0 : i32
    %c0_i32_1 = arith.constant 0 : i32
    return %c0_i32, %c0_i32_0 : i32, i32
  }
  func.func @transform_7(%arg0: i32) -> (i32, i32) {
    %c0_i32 = arith.constant 0 : i32
    %c0_i32_0 = arith.constant 0 : i32
    %c0_i32_1 = arith.constant 0 : i32
    return %c0_i32, %c0_i32_0 : i32, i32
  }
  func.func @transform_8(%arg0: i32) -> (i32, i32) {
    %c0_i32 = arith.constant 0 : i32
    %c0_i32_0 = arith.constant 0 : i32
    %c0_i32_1 = arith.constant 0 : i32
    return %c0_i32, %c0_i32_0 : i32, i32
  }
  func.func @transform_9(%arg0: i32) -> (i32, i32) {
    %c0_i32 = arith.constant 0 : i32
    %c0_i32_0 = arith.constant 0 : i32
    return %arg0, %c0_i32 : i32, i32
  }
  func.func @transform_10(%arg0: i32) -> (i32, i32) {
    %c0_i32 = arith.constant 0 : i32
    %c0_i32_0 = arith.constant 0 : i32
    return %arg0, %c0_i32 : i32, i32
  }
}

</mosaic_0001>

<llo_original>
// kernel: tpu_custom_call.1
$region0: #{tpu_custom_call.1}
  #allocation0 [shape = 'u32[]', space=smem, size = 0x4, offset = 0x4, fixed_abs, tag = 'smem constant byte address 0x4 - core index']
  #allocation1 [shape = 'u32[144,128]{1,0:T(1,128)}', space=vmem, size = 0x12000, scoped, tag = 'internal scratch']
  %s0 = inlined_call_operand.hbm [shape: f32[256,256], index: 0, kind: input, shape index: {}]
  %s1 = inlined_call_operand.hbm [shape: f32[256,128], index: 1, kind: input, shape index: {}]
  %s2 = inlined_call_operand.vmem [shape: f32[1,128], index: 2, kind: input, shape index: {}]
  %s3 = inlined_call_operand.hbm [shape: f32[128,128], index: 3, kind: input, shape index: {}]
  %s4 = inlined_call_operand.vmem [shape: f32[1,128], index: 4, kind: input, shape index: {}]
  %s5 = inlined_call_operand.hbm [shape: f32[128,128], index: 5, kind: input, shape index: {}]
  %s6 = inlined_call_operand.vmem [shape: f32[1,128], index: 6, kind: input, shape index: {}]
  %s7 = inlined_call_operand.hbm [shape: f32[128,256], index: 7, kind: input, shape index: {}]
  %s8 = inlined_call_operand.vmem [shape: f32[1,256], index: 8, kind: input, shape index: {}]
  %s9 = inlined_call_operand.hbm [shape: f32[256,128], index: 9, kind: output, shape index: {0}]
  %s10 = inlined_call_operand.hbm [shape: f32[256,256], index: 10, kind: output, shape index: {1}]
  %11 = xla_tuple %s9, %s10
  %s12 = sld [smem:[#allocation0]]
  $region97: #{tpu_custom_call.1} parent=0
    _
  %s14 = ssub.s32 1, %s12
  %s15 = scalar_select 0, %s14, %s12
  $region1: #{tpu_custom_call.1} parent=0
    #allocation2 [shape = 'u8[262144]{0}', space=vmem, size = 0x40000, scoped, tag = 'input window, operand 0']
    #allocation3 [shape = 's32[2]{0}', space=sflag, size = 0x8, scoped, tag = 'scoped memory for tpu_custom_call.1']
    #allocation4 [shape = 's32[2]{0}', space=sflag, size = 0x8, scoped, tag = 'scoped memory for tpu_custom_call.1']
    #allocation5 [shape = 'u8[131072]{0}', space=vmem, size = 0x20000, scoped, tag = 'input window, operand 1, single buffered']
    #allocation6 [shape = 's32[1]{0}', space=sflag, size = 0x4, scoped, tag = 'scoped memory for tpu_custom_call.1']
    #allocation7 [shape = 'u8[65536]{0}', space=vmem, size = 0x10000, scoped, tag = 'input window, operand 3, single buffered']
    #allocation8 [shape = 'u8[65536]{0}', space=vmem, size = 0x10000, scoped, tag = 'input window, operand 5, single buffered']
    #allocation9 [shape = 's32[1]{0}', space=sflag, size = 0x4, scoped, tag = 'scoped memory for tpu_custom_call.1']
    #allocation10 [shape = 'u8[131072]{0}', space=vmem, size = 0x20000, scoped, tag = 'input window, operand 7, single buffered']
    #allocation11 [shape = 'u8[131072]{0}', space=vmem, size = 0x20000, scoped, tag = 'output window, operand 0']
    #allocation12 [shape = 'u8[262144]{0}', space=vmem, size = 0x40000, scoped, tag = 'output window, operand 1']
    #allocation13 [shape = 's32[2]{0}', space=sflag, size = 0x8, scoped, tag = 'scoped memory for tpu_custom_call.1']
    %16 = vsyncpa [#allocation3], 0
    %s17 = scalar_lea.sflag [#allocation3], 1
    %18 = vsyncpa %s17, 0
    %19 = vsyncpa [#allocation6], 0
    %20 = vsyncpa [#allocation9], 0
    %21 = vsyncpa [#allocation4], 0
    %s22 = scalar_lea.sflag [#allocation4], 1
    %23 = vsyncpa %s22, 0
    %24 = vsyncpa [#allocation13], 0
    %s25 = scalar_lea.sflag [#allocation13], 1
    %26 = vsyncpa %s25, 0
    loop: start=0, step=1, limit=4
    $region2: #{tpu_custom_call.1} parent=1 // loop_pre_header
      _
    $region3: #{tpu_custom_call.1} parent=1 // loop_header
      %s28 = sphi 0, %s32
      %p29 = scmp.ge.s32.totalorder %s28, 4
      %s38 = sphi 0, %s40
      %s41 = sphi 0, %s38
      %s42 = sphi 0, %s41
      %s58 = sphi 0, %s42
      %s62 = sphi 0, %s62
      %s64 = sphi 0, %s62
      %s65 = sphi 0, %s64
      %s79 = sphi 0, %s65
      %s83 = sphi 0, %s83
      %s85 = sphi 0, %s83
      %s86 = sphi 0, %s85
      %s100 = sphi 0, %s86
      %s104 = sphi 0, %s104
      %s106 = sphi 0, %s104
      %s107 = sphi 0, %s106
      %s121 = sphi 0, %s107
      %s125 = sphi 0, %s125
      %s127 = sphi 0, %s125
      %s128 = sphi 0, %s127
      %s142 = sphi 0, %s128
      %s146 = sphi 0, %s146
      %s148 = sphi 0, %s146
      %s149 = sphi 0, %s148
      %s163 = sphi 0, %s149
      %s167 = sphi 0, %s167
      %s169 = sphi 0, %s167
      %s170 = sphi 0, %s169
      %s184 = sphi 0, %s170
      %s188 = sphi 0, %s188
      %s190 = sphi 0, %s188
      %s191 = sphi 0, %s190
      %s205 = sphi 0, %s191
      %s209 = sphi 0, %s209
      %s211 = sphi 0, %s209
      %s212 = sphi 0, %s211
      %s226 = sphi 0, %s212
      %s232 = sphi 0, %s234
      %s235 = sphi 0, %s232
      %s236 = sphi 0, %s235
      %s252 = sphi 0, %s236
      %s258 = sphi 0, %s260
      %s261 = sphi 0, %s258
      %s262 = sphi 0, %s261
      %s278 = sphi 0, %s262
    $region4: #{tpu_custom_call.1} parent=1 // loop_header_branch
      %31 = sbr.rel (%p29) target = $region8
    $region5: #{tpu_custom_call.1} parent=1 // loop_body
      %s33 = ssub.s32 %s28, 1
      %s34 = ssub.s32 %s28, 2
      %s35 = sadd.s32 %s28, 1
      %s36 = ssub.s32 %s28, %s35
      %p37 = scmp.eq.s32.totalorder %s36, 0
      %s39 = sadd.s32 %s38, 1
      %s40 = scalar_select %p37, %s38, %s39
      %p43 = pneg %p37
      %p44 = scmp.eq.s32.totalorder %s28, 1
      %p45 = por %p43, %p44
      %p46 = scmp.ne.s32.totalorder %s38, %s41
      %p47 = scmp.eq.s32.totalorder %s28, 0
      %p48 = por %p46, %p47
      %p49 = scmp.ne.s32.totalorder %s38, %s41
      %p50 = scmp.eq.s32.totalorder %s33, 1
      %p51 = por %p49, %p50
      %p52 = scmp.ne.s32.totalorder %s41, %s42
      %p53 = scmp.eq.s32.totalorder %s33, 0
      %p54 = por %p52, %p53
      %p55 = scmp.ne.s32.totalorder %s41, %s42
      %p56 = scmp.eq.s32.totalorder %s34, 1
      %p57 = por %p55, %p56
      %p59 = scmp.ne.s32.totalorder %s42, %s58
      %p60 = scmp.eq.s32.totalorder %s34, 0
      %p61 = por %p59, %p60
      %s63 = sadd.s32 %s62, 1
      %p66 = scmp.eq.s32.totalorder %s28, 1
      %p67 = scmp.ne.s32.totalorder %s62, %s64
      %p68 = scmp.eq.s32.totalorder %s28, 0
      %p69 = por %p67, %p68
      %p70 = scmp.ne.s32.totalorder %s62, %s64
      %p71 = scmp.eq.s32.totalorder %s33, 1
      %p72 = por %p70, %p71
      %p73 = scmp.ne.s32.totalorder %s64, %s65
      %p74 = scmp.eq.s32.totalorder %s33, 0
      %p75 = por %p73, %p74
      %p76 = scmp.ne.s32.totalorder %s64, %s65
      %p77 = scmp.eq.s32.totalorder %s34, 1
      %p78 = por %p76, %p77
      %p80 = scmp.ne.s32.totalorder %s65, %s79
      %p81 = scmp.eq.s32.totalorder %s34, 0
      %p82 = por %p80, %p81
      %s84 = sadd.s32 %s83, 1
      %p87 = scmp.eq.s32.totalorder %s28, 1
      %p88 = scmp.ne.s32.totalorder %s83, %s85
      %p89 = scmp.eq.s32.totalorder %s28, 0
      %p90 = por %p88, %p89
      %p91 = scmp.ne.s32.totalorder %s83, %s85
      %p92 = scmp.eq.s32.totalorder %s33, 1
      %p93 = por %p91, %p92
      %p94 = scmp.ne.s32.totalorder %s85, %s86
      %p95 = scmp.eq.s32.totalorder %s33, 0
      %p96 = por %p94, %p95
      %p97 = scmp.ne.s32.totalorder %s85, %s86
      %p98 = scmp.eq.s32.totalorder %s34, 1
      %p99 = por %p97, %p98
      %p101 = scmp.ne.s32.totalorder %s86, %s100
      %p102 = scmp.eq.s32.totalorder %s34, 0
      %p103 = por %p101, %p102
      %s105 = sadd.s32 %s104, 1
      %p108 = scmp.eq.s32.totalorder %s28, 1
      %p109 = scmp.ne.s32.totalorder %s104, %s106
      %p110 = scmp.eq.s32.totalorder %s28, 0
      %p111 = por %p109, %p110
      %p112 = scmp.ne.s32.totalorder %s104, %s106
      %p113 = scmp.eq.s32.totalorder %s33, 1
      %p114 = por %p112, %p113
      %p115 = scmp.ne.s32.totalorder %s106, %s107
      %p116 = scmp.eq.s32.totalorder %s33, 0
      %p117 = por %p115, %p116
      %p118 = scmp.ne.s32.totalorder %s106, %s107
      %p119 = scmp.eq.s32.totalorder %s34, 1
      %p120 = por %p118, %p119
      %p122 = scmp.ne.s32.totalorder %s107, %s121
      %p123 = scmp.eq.s32.totalorder %s34, 0
      %p124 = por %p122, %p123
      %s126 = sadd.s32 %s125, 1
      %p129 = scmp.eq.s32.totalorder %s28, 1
      %p130 = scmp.ne.s32.totalorder %s125, %s127
      %p131 = scmp.eq.s32.totalorder %s28, 0
      %p132 = por %p130, %p131
      %p133 = scmp.ne.s32.totalorder %s125, %s127
      %p134 = scmp.eq.s32.totalorder %s33, 1
      %p135 = por %p133, %p134
      %p136 = scmp.ne.s32.totalorder %s127, %s128
      %p137 = scmp.eq.s32.totalorder %s33, 0
      %p138 = por %p136, %p137
      %p139 = scmp.ne.s32.totalorder %s127, %s128
      %p140 = scmp.eq.s32.totalorder %s34, 1
      %p141 = por %p139, %p140
      %p143 = scmp.ne.s32.totalorder %s128, %s142
      %p144 = scmp.eq.s32.totalorder %s34, 0
      %p145 = por %p143, %p144
      %s147 = sadd.s32 %s146, 1
      %p150 = scmp.eq.s32.totalorder %s28, 1
      %p151 = scmp.ne.s32.totalorder %s146, %s148
      %p152 = scmp.eq.s32.totalorder %s28, 0
      %p153 = por %p151, %p152
      %p154 = scmp.ne.s32.totalorder %s146, %s148
      %p155 = scmp.eq.s32.totalorder %s33, 1
      %p156 = por %p154, %p155
      %p157 = scmp.ne.s32.totalorder %s148, %s149
      %p158 = scmp.eq.s32.totalorder %s33, 0
      %p159 = por %p157, %p158
      %p160 = scmp.ne.s32.totalorder %s148, %s149
      %p161 = scmp.eq.s32.totalorder %s34, 1
      %p162 = por %p160, %p161
      %p164 = scmp.ne.s32.totalorder %s149, %s163
      %p165 = scmp.eq.s32.totalorder %s34, 0
      %p166 = por %p164, %p165
      %s168 = sadd.s32 %s167, 1
      %p171 = scmp.eq.s32.totalorder %s28, 1
      %p172 = scmp.ne.s32.totalorder %s167, %s169
      %p173 = scmp.eq.s32.totalorder %s28, 0
      %p174 = por %p172, %p173
      %p175 = scmp.ne.s32.totalorder %s167, %s169
      %p176 = scmp.eq.s32.totalorder %s33, 1
      %p177 = por %p175, %p176
      %p178 = scmp.ne.s32.totalorder %s169, %s170
      %p179 = scmp.eq.s32.totalorder %s33, 0
      %p180 = por %p178, %p179
      %p181 = scmp.ne.s32.totalorder %s169, %s170
      %p182 = scmp.eq.s32.totalorder %s34, 1
      %p183 = por %p181, %p182
      %p185 = scmp.ne.s32.totalorder %s170, %s184
      %p186 = scmp.eq.s32.totalorder %s34, 0
      %p187 = por %p185, %p186
      %s189 = sadd.s32 %s188, 1
      %p192 = scmp.eq.s32.totalorder %s28, 1
      %p193 = scmp.ne.s32.totalorder %s188, %s190
      %p194 = scmp.eq.s32.totalorder %s28, 0
      %p195 = por %p193, %p194
      %p196 = scmp.ne.s32.totalorder %s188, %s190
      %p197 = scmp.eq.s32.totalorder %s33, 1
      %p198 = por %p196, %p197
      %p199 = scmp.ne.s32.totalorder %s190, %s191
      %p200 = scmp.eq.s32.totalorder %s33, 0
      %p201 = por %p199, %p200
      %p202 = scmp.ne.s32.totalorder %s190, %s191
      %p203 = scmp.eq.s32.totalorder %s34, 1
      %p204 = por %p202, %p203
      %p206 = scmp.ne.s32.totalorder %s191, %s205
      %p207 = scmp.eq.s32.totalorder %s34, 0
      %p208 = por %p206, %p207
      %s210 = sadd.s32 %s209, 1
      %p213 = scmp.eq.s32.totalorder %s28, 1
      %p214 = scmp.ne.s32.totalorder %s209, %s211
      %p215 = scmp.eq.s32.totalorder %s28, 0
      %p216 = por %p214, %p215
      %p217 = scmp.ne.s32.totalorder %s209, %s211
      %p218 = scmp.eq.s32.totalorder %s33, 1
      %p219 = por %p217, %p218
      %p220 = scmp.ne.s32.totalorder %s211, %s212
      %p221 = scmp.eq.s32.totalorder %s33, 0
      %p222 = por %p220, %p221
      %p223 = scmp.ne.s32.totalorder %s211, %s212
      %p224 = scmp.eq.s32.totalorder %s34, 1
      %p225 = por %p223, %p224
      %p227 = scmp.ne.s32.totalorder %s212, %s226
      %p228 = scmp.eq.s32.totalorder %s34, 0
      %p229 = por %p227, %p228
      %s230 = ssub.s32 %s28, %s35
      %p231 = scmp.eq.s32.totalorder %s230, 0
      %s233 = sadd.s32 %s232, 1
      %s234 = scalar_select %p231, %s232, %s233
      %p237 = pneg %p231
      %p238 = scmp.eq.s32.totalorder %s28, 1
      %p239 = por %p237, %p238
      %p240 = scmp.ne.s32.totalorder %s232, %s235
      %p241 = scmp.eq.s32.totalorder %s28, 0
      %p242 = por %p240, %p241
      %p243 = scmp.ne.s32.totalorder %s232, %s235
      %p244 = scmp.eq.s32.totalorder %s33, 1
      %p245 = por %p243, %p244
      %p246 = scmp.ne.s32.totalorder %s235, %s236
      %p247 = scmp.eq.s32.totalorder %s33, 0
      %p248 = por %p246, %p247
      %p249 = scmp.ne.s32.totalorder %s235, %s236
      %p250 = scmp.eq.s32.totalorder %s34, 1
      %p251 = por %p249, %p250
      %p253 = scmp.ne.s32.totalorder %s236, %s252
      %p254 = scmp.eq.s32.totalorder %s34, 0
      %p255 = por %p253, %p254
      %s256 = ssub.s32 %s28, %s35
      %p257 = scmp.eq.s32.totalorder %s256, 0
      %s259 = sadd.s32 %s258, 1
      %s260 = scalar_select %p257, %s258, %s259
      %p263 = pneg %p257
      %p264 = scmp.eq.s32.totalorder %s28, 1
      %p265 = por %p263, %p264
      %p266 = scmp.ne.s32.totalorder %s258, %s261
      %p267 = scmp.eq.s32.totalorder %s28, 0
      %p268 = por %p266, %p267
      %p269 = scmp.ne.s32.totalorder %s258, %s261
      %p270 = scmp.eq.s32.totalorder %s33, 1
      %p271 = por %p269, %p270
      %p272 = scmp.ne.s32.totalorder %s261, %s262
      %p273 = scmp.eq.s32.totalorder %s33, 0
      %p274 = por %p272, %p273
      %p275 = scmp.ne.s32.totalorder %s261, %s262
      %p276 = scmp.eq.s32.totalorder %s34, 1
      %p277 = por %p275, %p276
      %p279 = scmp.ne.s32.totalorder %s262, %s278
      %p280 = scmp.eq.s32.totalorder %s34, 0
      %p281 = por %p279, %p280
      %p282 = scmp.le.s32.totalorder 1, %s28
      %p283 = scmp.lt.s32.totalorder %s28, 3
      %p284 = pnand %p282, %p283
      %p285 = pneg %p284
      // Predicated region
      $region9: #{tpu_custom_call.1} parent=5 // pred_check
        _
      $region10: #{tpu_custom_call.1} parent=5 // pred_check_branch
        %287 = sbr.rel (%p284) target = $region12
      $region11: #{tpu_custom_call.1} parent=5 // pred_region
        %s288 = ssub.s32 %s28, 1
        // Predicated region
        $region13: #{tpu_custom_call.1} parent=11 // pred_check
          %p289 = pneg %p75
        $region14: #{tpu_custom_call.1} parent=11 // pred_check_branch
          %291 = sbr.rel (%p289) target = $region16
        $region15: #{tpu_custom_call.1} parent=11 // pred_region
          %s293 = ssub.s32 4096, 4096
          %294 = vsyncadd [#allocation6], %s293
          %s295 = sshll.u32 [#allocation5], 4
          %s296 = int_to_ptr.vmem [resolvable:$true] %s295
          %301 = dma.hbm_to_vmem [thread:$0]  %s1, 4096, %s296, [#allocation6], 128, 128, 8
        $region16: #{tpu_custom_call.1} parent=11 // pred_fallthru
          _
        // Predicated region
        $region17: #{tpu_custom_call.1} parent=11 // pred_check
          %p302 = pneg %p96
        $region18: #{tpu_custom_call.1} parent=11 // pred_check_branch
          %304 = sbr.rel (%p302) target = $region20
        $region19: #{tpu_custom_call.1} parent=11 // pred_region
          _
        $region20: #{tpu_custom_call.1} parent=11 // pred_fallthru
          _
        // Predicated region
        $region21: #{tpu_custom_call.1} parent=11 // pred_check
          %p305 = pneg %p117
        $region22: #{tpu_custom_call.1} parent=11 // pred_check_branch
          %307 = sbr.rel (%p305) target = $region24
        $region23: #{tpu_custom_call.1} parent=11 // pred_region
          %s309 = ssub.s32 2048, 2048
          %310 = vsyncadd [#allocation6], %s309
          %s311 = sshll.u32 [#allocation7], 4
          %s312 = int_to_ptr.vmem [resolvable:$true] %s311
          %317 = dma.hbm_to_vmem [thread:$0]  %s3, 2048, %s312, [#allocation6], 128, 128, 8
        $region24: #{tpu_custom_call.1} parent=11 // pred_fallthru
          _
        // Predicated region
        $region25: #{tpu_custom_call.1} parent=11 // pred_check
          %p318 = pneg %p138
        $region26: #{tpu_custom_call.1} parent=11 // pred_check_branch
          %320 = sbr.rel (%p318) target = $region28
        $region27: #{tpu_custom_call.1} parent=11 // pred_region
          _
        $region28: #{tpu_custom_call.1} parent=11 // pred_fallthru
          _
        // Predicated region
        $region29: #{tpu_custom_call.1} parent=11 // pred_check
          %p321 = pneg %p159
        $region30: #{tpu_custom_call.1} parent=11 // pred_check_branch
          %323 = sbr.rel (%p321) target = $region32
        $region31: #{tpu_custom_call.1} parent=11 // pred_region
          %s325 = ssub.s32 2048, 2048
          %326 = vsyncadd [#allocation9], %s325
          %s327 = sshll.u32 [#allocation8], 4
          %s328 = int_to_ptr.vmem [resolvable:$true] %s327
          %333 = dma.hbm_to_vmem [thread:$0]  %s5, 2048, %s328, [#allocation9], 128, 128, 8
        $region32: #{tpu_custom_call.1} parent=11 // pred_fallthru
          _
        // Predicated region
        $region33: #{tpu_custom_call.1} parent=11 // pred_check
          %p334 = pneg %p180
        $region34: #{tpu_custom_call.1} parent=11 // pred_check_branch
          %336 = sbr.rel (%p334) target = $region36
        $region35: #{tpu_custom_call.1} parent=11 // pred_region
          _
        $region36: #{tpu_custom_call.1} parent=11 // pred_fallthru
          _
        // Predicated region
        $region37: #{tpu_custom_call.1} parent=11 // pred_check
          %p337 = pneg %p201
        $region38: #{tpu_custom_call.1} parent=11 // pred_check_branch
          %339 = sbr.rel (%p337) target = $region40
        $region39: #{tpu_custom_call.1} parent=11 // pred_region
          %s341 = ssub.s32 4096, 4096
          %342 = vsyncadd [#allocation9], %s341
          %s343 = sshll.u32 [#allocation10], 4
          %s344 = int_to_ptr.vmem [resolvable:$true] %s343
          %349 = dma.hbm_to_vmem [thread:$0]  %s7, 4096, %s344, [#allocation9], 256, 256, 16
        $region40: #{tpu_custom_call.1} parent=11 // pred_fallthru
          _
        // Predicated region
        $region41: #{tpu_custom_call.1} parent=11 // pred_check
          %p350 = pneg %p222
        $region42: #{tpu_custom_call.1} parent=11 // pred_check_branch
          %352 = sbr.rel (%p350) target = $region44
        $region43: #{tpu_custom_call.1} parent=11 // pred_region
          _
        $region44: #{tpu_custom_call.1} parent=11 // pred_fallthru
          _
      $region12: #{tpu_custom_call.1} parent=5 // pred_fallthru
        _
      %p353 = scmp.lt.s32.totalorder %s28, 2
      // Predicated region
      $region45: #{tpu_custom_call.1} parent=5 // pred_check
        %p354 = pneg %p353
      $region46: #{tpu_custom_call.1} parent=5 // pred_check_branch
        %356 = sbr.rel (%p354) target = $region48
      $region47: #{tpu_custom_call.1} parent=5 // pred_region
        // Predicated region
        $region49: #{tpu_custom_call.1} parent=47 // pred_check
          %p357 = pneg %p48
        $region50: #{tpu_custom_call.1} parent=47 // pred_check_branch
          %359 = sbr.rel (%p357) target = $region52
        $region51: #{tpu_custom_call.1} parent=47 // pred_region
          %s360 = sand.u32 %s38, 1
          %s361 = scalar_lea.sflag [#allocation3], %s360
          %s362 = sand.u32 %s38, 1
          %s363 = smul.addr %s362, 256
          %s364 = scalar_lea.vmem [#allocation2], %s363
          %s365 = smul.u32 16, %s28
          %s367 = ssub.s32 4096, 4096
          %368 = vsyncadd %s361, %s367
          %s369 = smul.addr %s365, 2
          %s370 = smul.addr %s369, 128
          %s371 = scalar_lea.hbm %s0, %s370
          %s372 = sshll.u32 %s364, 4
          %s373 = int_to_ptr.vmem [resolvable:$true] %s372
          %378 = dma.hbm_to_vmem [thread:$0]  %s371, 4096, %s373, %s361, 256, 256, 16
        $region52: #{tpu_custom_call.1} parent=47 // pred_fallthru
          _
      $region48: #{tpu_custom_call.1} parent=5 // pred_fallthru
        _
      %p379 = scmp.le.s32.totalorder 1, %s28
      %p380 = scmp.lt.s32.totalorder %s28, 3
      %p381 = pnand %p379, %p380
      %p382 = pneg %p381
      // Predicated region
      $region53: #{tpu_custom_call.1} parent=5 // pred_check
        _
      $region54: #{tpu_custom_call.1} parent=5 // pred_check_branch
        %384 = sbr.rel (%p381) target = $region56
      $region55: #{tpu_custom_call.1} parent=5 // pred_region
        %s385 = ssub.s32 %s28, 1
        %s386 = sand.u32 %s41, 1
        %s387 = scalar_lea.sflag [#allocation3], %s386
        %s388 = sand.u32 %s41, 1
        %s389 = smul.addr %s388, 256
        %s390 = scalar_lea.vmem [#allocation2], %s389
        // Predicated region
        $region57: #{tpu_custom_call.1} parent=55 // pred_check
          %p391 = pneg %p54
        $region58: #{tpu_custom_call.1} parent=55 // pred_check_branch
          %393 = sbr.rel (%p391) target = $region60
        $region59: #{tpu_custom_call.1} parent=55 // pred_region
          %394 = dma.done %s387, 4096
        $region60: #{tpu_custom_call.1} parent=55 // pred_fallthru
          _
        // Predicated region
        $region61: #{tpu_custom_call.1} parent=55 // pred_check
          %p395 = pneg %p75
        $region62: #{tpu_custom_call.1} parent=55 // pred_check_branch
          %397 = sbr.rel (%p395) target = $region64
        $region63: #{tpu_custom_call.1} parent=55 // pred_region
          %398 = dma.done [#allocation6], 4096
        $region64: #{tpu_custom_call.1} parent=55 // pred_fallthru
          _
        // Predicated region
        $region65: #{tpu_custom_call.1} parent=55 // pred_check
          %p399 = pneg %p117
        $region66: #{tpu_custom_call.1} parent=55 // pred_check_branch
          %401 = sbr.rel (%p399) target = $region68
        $region67: #{tpu_custom_call.1} parent=55 // pred_region
          %402 = dma.done [#allocation6], 2048
        $region68: #{tpu_custom_call.1} parent=55 // pred_fallthru
          _
        // Predicated region
        $region69: #{tpu_custom_call.1} parent=55 // pred_check
          %p403 = pneg %p159
        $region70: #{tpu_custom_call.1} parent=55 // pred_check_branch
          %405 = sbr.rel (%p403) target = $region72
        $region71: #{tpu_custom_call.1} parent=55 // pred_region
          %406 = dma.done [#allocation9], 2048
        $region72: #{tpu_custom_call.1} parent=55 // pred_fallthru
          _
        // Predicated region
        $region73: #{tpu_custom_call.1} parent=55 // pred_check
          %p407 = pneg %p201
        $region74: #{tpu_custom_call.1} parent=55 // pred_check_branch
          %409 = sbr.rel (%p407) target = $region76
        $region75: #{tpu_custom_call.1} parent=55 // pred_region
          %410 = dma.done [#allocation9], 4096
        $region76: #{tpu_custom_call.1} parent=55 // pred_fallthru
          _
        %s411 = sand.u32 %s41, 1
        %s412 = scalar_lea.sflag [#allocation3], %s411
        %s413 = sand.u32 %s41, 1
        %s414 = smul.addr %s413, 256
        %s415 = scalar_lea.vmem [#allocation2], %s414
        %p416 = pneg %p54
        %p417 = pneg %p51
        %p418 = pneg %p75
        %p419 = pneg %p72
        %p420 = pneg %p96
        %p421 = pneg %p93
        %p422 = pneg %p117
        %p423 = pneg %p114
        %p424 = pneg %p138
        %p425 = pneg %p135
        %p426 = pneg %p159
        %p427 = pneg %p156
        %p428 = pneg %p180
        %p429 = pneg %p177
        %p430 = pneg %p201
        %p431 = pneg %p198
        %p432 = pneg %p222
        %p433 = pneg %p219
        %p434 = pneg %p248
        %p435 = pneg %p245
        %s436 = sand.u32 %s235, 1
        %s437 = scalar_lea.sflag [#allocation4], %s436
        %s438 = sand.u32 %s235, 1
        %s439 = smul.addr %s438, 128
        %s440 = scalar_lea.vmem [#allocation11], %s439
        %p441 = pneg %p274
        %p442 = pneg %p271
        %s443 = sand.u32 %s261, 1
        %s444 = scalar_lea.sflag [#allocation13], %s443
        %s445 = sand.u32 %s261, 1
        %s446 = smul.addr %s445, 256
        %s447 = scalar_lea.vmem [#allocation12], %s446
        %s448 = smul.u32 16, %s33
        %s449 = smul.u32 16, %s33
        %s450 = smul.u32 16, %s33
        %v451 = vld [vmem:[%s390] sm:$0xff]
        %v452 = vld [vmem:[%s390 + $0x8] sm:$0xff]
        %v453 = vld [vmem:[%s390 + $0x10] sm:$0xff]
        %v454 = vld [vmem:[%s390 + $0x18] sm:$0xff]
        %v455 = vld [vmem:[%s390 + $0x20] sm:$0xff]
        %v456 = vld [vmem:[%s390 + $0x28] sm:$0xff]
        %v457 = vld [vmem:[%s390 + $0x30] sm:$0xff]
        %v458 = vld [vmem:[%s390 + $0x38] sm:$0xff]
        %v459 = vld [vmem:[%s390 + $0x40] sm:$0xff]
        %v460 = vld [vmem:[%s390 + $0x48] sm:$0xff]
        %v461 = vld [vmem:[%s390 + $0x50] sm:$0xff]
        %v462 = vld [vmem:[%s390 + $0x58] sm:$0xff]
        %v463 = vld [vmem:[%s390 + $0x60] sm:$0xff]
        %v464 = vld [vmem:[%s390 + $0x68] sm:$0xff]
        %v465 = vld [vmem:[%s390 + $0x70] sm:$0xff]
        %v466 = vld [vmem:[%s390 + $0x78] sm:$0xff]
        %v467 = vld [vmem:[%s390 + $0x80] sm:$0xff]
        %v468 = vld [vmem:[%s390 + $0x88] sm:$0xff]
        %v469 = vld [vmem:[%s390 + $0x90] sm:$0xff]
        %v470 = vld [vmem:[%s390 + $0x98] sm:$0xff]
        %v471 = vld [vmem:[%s390 + $0xa0] sm:$0xff]
        %v472 = vld [vmem:[%s390 + $0xa8] sm:$0xff]
        %v473 = vld [vmem:[%s390 + $0xb0] sm:$0xff]
        %v474 = vld [vmem:[%s390 + $0xb8] sm:$0xff]
        %v475 = vld [vmem:[%s390 + $0xc0] sm:$0xff]
        %v476 = vld [vmem:[%s390 + $0xc8] sm:$0xff]
        %v477 = vld [vmem:[%s390 + $0xd0] sm:$0xff]
        %v478 = vld [vmem:[%s390 + $0xd8] sm:$0xff]
        %v479 = vld [vmem:[%s390 + $0xe0] sm:$0xff]
        %v480 = vld [vmem:[%s390 + $0xe8] sm:$0xff]
        %v481 = vld [vmem:[%s390 + $0xf0] sm:$0xff]
        %v482 = vld [vmem:[%s390 + $0xf8] sm:$0xff]
        %v483 = vadd.f32 %v451, %v452
        %484 = vadd.xlane.f32.xlu0 %v483
        %v485 = vpop.xlane.xlu0 %484
        %v486 = vadd.f32 %v453, %v454
        %487 = vadd.xlane.f32.xlu0 %v486
        %v488 = vpop.xlane.xlu0 %487
        %v489 = vadd.f32 %v455, %v456
        %490 = vadd.xlane.f32.xlu0 %v489
        %v491 = vpop.xlane.xlu0 %490
        %v492 = vadd.f32 %v457, %v458
        %493 = vadd.xlane.f32.xlu0 %v492
        %v494 = vpop.xlane.xlu0 %493
        %v495 = vadd.f32 %v459, %v460
        %496 = vadd.xlane.f32.xlu0 %v495
        %v497 = vpop.xlane.xlu0 %496
        %v498 = vadd.f32 %v461, %v462
        %499 = vadd.xlane.f32.xlu0 %v498
        %v500 = vpop.xlane.xlu0 %499
        %v501 = vadd.f32 %v463, %v464
        %502 = vadd.xlane.f32.xlu0 %v501
        %v503 = vpop.xlane.xlu0 %502
        %v504 = vadd.f32 %v465, %v466
        %505 = vadd.xlane.f32.xlu0 %v504
        %v506 = vpop.xlane.xlu0 %505
        %v507 = vadd.f32 %v467, %v468
        %508 = vadd.xlane.f32.xlu0 %v507
        %v509 = vpop.xlane.xlu0 %508
        %v510 = vadd.f32 %v469, %v470
        %511 = vadd.xlane.f32.xlu0 %v510
        %v512 = vpop.xlane.xlu0 %511
        %v513 = vadd.f32 %v471, %v472
        %514 = vadd.xlane.f32.xlu0 %v513
        %v515 = vpop.xlane.xlu0 %514
        %v516 = vadd.f32 %v473, %v474
        %517 = vadd.xlane.f32.xlu0 %v516
        %v518 = vpop.xlane.xlu0 %517
        %v519 = vadd.f32 %v475, %v476
        %520 = vadd.xlane.f32.xlu0 %v519
        %v521 = vpop.xlane.xlu0 %520
        %v522 = vadd.f32 %v477, %v478
        %523 = vadd.xlane.f32.xlu0 %v522
        %v524 = vpop.xlane.xlu0 %523
        %v525 = vadd.f32 %v479, %v480
        %526 = vadd.xlane.f32.xlu0 %v525
        %v527 = vpop.xlane.xlu0 %526
        %v528 = vadd.f32 %v481, %v482
        %529 = vadd.xlane.f32.xlu0 %v528
        %v530 = vpop.xlane.xlu0 %529
        %v531 = vrcp.pop 256.0
        %v532 = vmul.f32 %v485, %v531
        %v533 = vmul.f32 %v488, %v531
        %v534 = vmul.f32 %v491, %v531
        %v535 = vmul.f32 %v494, %v531
        %v536 = vmul.f32 %v497, %v531
        %v537 = vmul.f32 %v500, %v531
        %v538 = vmul.f32 %v503, %v531
        %v539 = vmul.f32 %v506, %v531
        %v540 = vmul.f32 %v509, %v531
        %v541 = vmul.f32 %v512, %v531
        %v542 = vmul.f32 %v515, %v531
        %v543 = vmul.f32 %v518, %v531
        %v544 = vmul.f32 %v521, %v531
        %v545 = vmul.f32 %v524, %v531
        %v546 = vmul.f32 %v527, %v531
        %v547 = vmul.f32 %v530, %v531
        %v548 = vsub.f32 %v451, %v532
        %v549 = vsub.f32 %v452, %v532
        %v550 = vsub.f32 %v453, %v533
        %v551 = vsub.f32 %v454, %v533
        %v552 = vsub.f32 %v455, %v534
        %v553 = vsub.f32 %v456, %v534
        %v554 = vsub.f32 %v457, %v535
        %v555 = vsub.f32 %v458, %v535
        %v556 = vsub.f32 %v459, %v536
        %v557 = vsub.f32 %v460, %v536
        %v558 = vsub.f32 %v461, %v537
        %v559 = vsub.f32 %v462, %v537
        %v560 = vsub.f32 %v463, %v538
        %v561 = vsub.f32 %v464, %v538
        %v562 = vsub.f32 %v465, %v539
        %v563 = vsub.f32 %v466, %v539
        %v564 = vsub.f32 %v467, %v540
        %v565 = vsub.f32 %v468, %v540
        %v566 = vsub.f32 %v469, %v541
        %v567 = vsub.f32 %v470, %v541
        %v568 = vsub.f32 %v471, %v542
        %v569 = vsub.f32 %v472, %v542
        %v570 = vsub.f32 %v473, %v543
        %v571 = vsub.f32 %v474, %v543
        %v572 = vsub.f32 %v475, %v544
        %v573 = vsub.f32 %v476, %v544
        %v574 = vsub.f32 %v477, %v545
        %v575 = vsub.f32 %v478, %v545
        %v576 = vsub.f32 %v479, %v546
        %v577 = vsub.f32 %v480, %v546
        %v578 = vsub.f32 %v481, %v547
        %v579 = vsub.f32 %v482, %v547
        %v580 = vmul.f32 %v548, %v548
        %v581 = vmul.f32 %v549, %v549
        %v582 = vmul.f32 %v550, %v550
        %v583 = vmul.f32 %v551, %v551
        %v584 = vmul.f32 %v552, %v552
        %v585 = vmul.f32 %v553, %v553
        %v586 = vmul.f32 %v554, %v554
        %v587 = vmul.f32 %v555, %v555
        %v588 = vmul.f32 %v556, %v556
        %v589 = vmul.f32 %v557, %v557
        %v590 = vmul.f32 %v558, %v558
        %v591 = vmul.f32 %v559, %v559
        %v592 = vmul.f32 %v560, %v560
        %v593 = vmul.f32 %v561, %v561
        %v594 = vmul.f32 %v562, %v562
        %v595 = vmul.f32 %v563, %v563
        %v596 = vmul.f32 %v564, %v564
        %v597 = vmul.f32 %v565, %v565
        %v598 = vmul.f32 %v566, %v566
        %v599 = vmul.f32 %v567, %v567
        %v600 = vmul.f32 %v568, %v568
        %v601 = vmul.f32 %v569, %v569
        %v602 = vmul.f32 %v570, %v570
        %v603 = vmul.f32 %v571, %v571
        %v604 = vmul.f32 %v572, %v572
        %v605 = vmul.f32 %v573, %v573
        %v606 = vmul.f32 %v574, %v574
        %v607 = vmul.f32 %v575, %v575
        %v608 = vmul.f32 %v576, %v576
        %v609 = vmul.f32 %v577, %v577
        %v610 = vmul.f32 %v578, %v578
        %v611 = vmul.f32 %v579, %v579
        %v612 = vadd.f32 %v580, %v581
        %613 = vadd.xlane.f32.xlu0 %v612
        %v614 = vpop.xlane.xlu0 %613
        %v615 = vadd.f32 %v582, %v583
        %616 = vadd.xlane.f32.xlu0 %v615
        %v617 = vpop.xlane.xlu0 %616
        %v618 = vadd.f32 %v584, %v585
        %619 = vadd.xlane.f32.xlu0 %v618
        %v620 = vpop.xlane.xlu0 %619
        %v621 = vadd.f32 %v586, %v587
        %622 = vadd.xlane.f32.xlu0 %v621
        %v623 = vpop.xlane.xlu0 %622
        %v624 = vadd.f32 %v588, %v589
        %625 = vadd.xlane.f32.xlu0 %v624
        %v626 = vpop.xlane.xlu0 %625
        %v627 = vadd.f32 %v590, %v591
        %628 = vadd.xlane.f32.xlu0 %v627
        %v629 = vpop.xlane.xlu0 %628
        %v630 = vadd.f32 %v592, %v593
        %631 = vadd.xlane.f32.xlu0 %v630
        %v632 = vpop.xlane.xlu0 %631
        %v633 = vadd.f32 %v594, %v595
        %634 = vadd.xlane.f32.xlu0 %v633
        %v635 = vpop.xlane.xlu0 %634
        %v636 = vadd.f32 %v596, %v597
        %637 = vadd.xlane.f32.xlu0 %v636
        %v638 = vpop.xlane.xlu0 %637
        %v639 = vadd.f32 %v598, %v599
        %640 = vadd.xlane.f32.xlu0 %v639
        %v641 = vpop.xlane.xlu0 %640
        %v642 = vadd.f32 %v600, %v601
        %643 = vadd.xlane.f32.xlu0 %v642
        %v644 = vpop.xlane.xlu0 %643
        %v645 = vadd.f32 %v602, %v603
        %646 = vadd.xlane.f32.xlu0 %v645
        %v647 = vpop.xlane.xlu0 %646
        %v648 = vadd.f32 %v604, %v605
        %649 = vadd.xlane.f32.xlu0 %v648
        %v650 = vpop.xlane.xlu0 %649
        %v651 = vadd.f32 %v606, %v607
        %652 = vadd.xlane.f32.xlu0 %v651
        %v653 = vpop.xlane.xlu0 %652
        %v654 = vadd.f32 %v608, %v609
        %655 = vadd.xlane.f32.xlu0 %v654
        %v656 = vpop.xlane.xlu0 %655
        %v657 = vadd.f32 %v610, %v611
        %658 = vadd.xlane.f32.xlu0 %v657
        %v659 = vpop.xlane.xlu0 %658
        %v660 = vrcp.pop 255.0
        %v661 = vmul.f32 %v614, %v660
        %v662 = vmul.f32 %v617, %v660
        %v663 = vmul.f32 %v620, %v660
        %v664 = vmul.f32 %v623, %v660
        %v665 = vmul.f32 %v626, %v660
        %v666 = vmul.f32 %v629, %v660
        %v667 = vmul.f32 %v632, %v660
        %v668 = vmul.f32 %v635, %v660
        %v669 = vmul.f32 %v638, %v660
        %v670 = vmul.f32 %v641, %v660
        %v671 = vmul.f32 %v644, %v660
        %v672 = vmul.f32 %v647, %v660
        %v673 = vmul.f32 %v650, %v660
        %v674 = vmul.f32 %v653, %v660
        %v675 = vmul.f32 %v656, %v660
        %v676 = vmul.f32 %v659, %v660
        %v677 = vrsqrt.pop %v661
        %v678 = vmul.f32 %v661, %v677
        %vm679 = vcmp.eq.f32.partialorder %v661, inf
        %v680 = vsel %vm679, %v661, %v678
        %vm681 = vcmp.eq.f32.partialorder %v661, 0.0
        %v682 = vand.u32 %v661, 2147483648
        %v683 = vsel %vm681, %v682, %v680
        %v684 = vrsqrt.pop %v662
        %v685 = vmul.f32 %v662, %v684
        %vm686 = vcmp.eq.f32.partialorder %v662, inf
        %v687 = vsel %vm686, %v662, %v685
        %vm688 = vcmp.eq.f32.partialorder %v662, 0.0
        %v689 = vand.u32 %v662, 2147483648
        %v690 = vsel %vm688, %v689, %v687
        %v691 = vrsqrt.pop %v663
        %v692 = vmul.f32 %v663, %v691
        %vm693 = vcmp.eq.f32.partialorder %v663, inf
        %v694 = vsel %vm693, %v663, %v692
        %vm695 = vcmp.eq.f32.partialorder %v663, 0.0
        %v696 = vand.u32 %v663, 2147483648
        %v697 = vsel %vm695, %v696, %v694
        %v698 = vrsqrt.pop %v664
        %v699 = vmul.f32 %v664, %v698
        %vm700 = vcmp.eq.f32.partialorder %v664, inf
        %v701 = vsel %vm700, %v664, %v699
        %vm702 = vcmp.eq.f32.partialorder %v664, 0.0
        %v703 = vand.u32 %v664, 2147483648
        %v704 = vsel %vm702, %v703, %v701
        %v705 = vrsqrt.pop %v665
        %v706 = vmul.f32 %v665, %v705
        %vm707 = vcmp.eq.f32.partialorder %v665, inf
        %v708 = vsel %vm707, %v665, %v706
        %vm709 = vcmp.eq.f32.partialorder %v665, 0.0
        %v710 = vand.u32 %v665, 2147483648
        %v711 = vsel %vm709, %v710, %v708
        %v712 = vrsqrt.pop %v666
        %v713 = vmul.f32 %v666, %v712
        %vm714 = vcmp.eq.f32.partialorder %v666, inf
        %v715 = vsel %vm714, %v666, %v713
        %vm716 = vcmp.eq.f32.partialorder %v666, 0.0
        %v717 = vand.u32 %v666, 2147483648
        %v718 = vsel %vm716, %v717, %v715
        %v719 = vrsqrt.pop %v667
        %v720 = vmul.f32 %v667, %v719
        %vm721 = vcmp.eq.f32.partialorder %v667, inf
        %v722 = vsel %vm721, %v667, %v720
        %vm723 = vcmp.eq.f32.partialorder %v667, 0.0
        %v724 = vand.u32 %v667, 2147483648
        %v725 = vsel %vm723, %v724, %v722
        %v726 = vrsqrt.pop %v668
        %v727 = vmul.f32 %v668, %v726
        %vm728 = vcmp.eq.f32.partialorder %v668, inf
        %v729 = vsel %vm728, %v668, %v727
        %vm730 = vcmp.eq.f32.partialorder %v668, 0.0
        %v731 = vand.u32 %v668, 2147483648
        %v732 = vsel %vm730, %v731, %v729
        %v733 = vrsqrt.pop %v669
        %v734 = vmul.f32 %v669, %v733
        %vm735 = vcmp.eq.f32.partialorder %v669, inf
        %v736 = vsel %vm735, %v669, %v734
        %vm737 = vcmp.eq.f32.partialorder %v669, 0.0
        %v738 = vand.u32 %v669, 2147483648
        %v739 = vsel %vm737, %v738, %v736
        %v740 = vrsqrt.pop %v670
        %v741 = vmul.f32 %v670, %v740
        %vm742 = vcmp.eq.f32.partialorder %v670, inf
        %v743 = vsel %vm742, %v670, %v741
        %vm744 = vcmp.eq.f32.partialorder %v670, 0.0
        %v745 = vand.u32 %v670, 2147483648
        %v746 = vsel %vm744, %v745, %v743
        %v747 = vrsqrt.pop %v671
        %v748 = vmul.f32 %v671, %v747
        %vm749 = vcmp.eq.f32.partialorder %v671, inf
        %v750 = vsel %vm749, %v671, %v748
        %vm751 = vcmp.eq.f32.partialorder %v671, 0.0
        %v752 = vand.u32 %v671, 2147483648
        %v753 = vsel %vm751, %v752, %v750
        %v754 = vrsqrt.pop %v672
        %v755 = vmul.f32 %v672, %v754
        %vm756 = vcmp.eq.f32.partialorder %v672, inf
        %v757 = vsel %vm756, %v672, %v755
        %vm758 = vcmp.eq.f32.partialorder %v672, 0.0
        %v759 = vand.u32 %v672, 2147483648
        %v760 = vsel %vm758, %v759, %v757
        %v761 = vrsqrt.pop %v673
        %v762 = vmul.f32 %v673, %v761
        %vm763 = vcmp.eq.f32.partialorder %v673, inf
        %v764 = vsel %vm763, %v673, %v762
        %vm765 = vcmp.eq.f32.partialorder %v673, 0.0
        %v766 = vand.u32 %v673, 2147483648
        %v767 = vsel %vm765, %v766, %v764
        %v768 = vrsqrt.pop %v674
        %v769 = vmul.f32 %v674, %v768
        %vm770 = vcmp.eq.f32.partialorder %v674, inf
        %v771 = vsel %vm770, %v674, %v769
        %vm772 = vcmp.eq.f32.partialorder %v674, 0.0
        %v773 = vand.u32 %v674, 2147483648
        %v774 = vsel %vm772, %v773, %v771
        %v775 = vrsqrt.pop %v675
        %v776 = vmul.f32 %v675, %v775
        %vm777 = vcmp.eq.f32.partialorder %v675, inf
        %v778 = vsel %vm777, %v675, %v776
        %vm779 = vcmp.eq.f32.partialorder %v675, 0.0
        %v780 = vand.u32 %v675, 2147483648
        %v781 = vsel %vm779, %v780, %v778
        %v782 = vrsqrt.pop %v676
        %v783 = vmul.f32 %v676, %v782
        %vm784 = vcmp.eq.f32.partialorder %v676, inf
        %v785 = vsel %vm784, %v676, %v783
        %vm786 = vcmp.eq.f32.partialorder %v676, 0.0
        %v787 = vand.u32 %v676, 2147483648
        %v788 = vsel %vm786, %v787, %v785
        %v789 = vadd.f32 %v683, 1e-05
        %v790 = vadd.f32 %v690, 1e-05
        %v791 = vadd.f32 %v697, 1e-05
        %v792 = vadd.f32 %v704, 1e-05
        %v793 = vadd.f32 %v711, 1e-05
        %v794 = vadd.f32 %v718, 1e-05
        %v795 = vadd.f32 %v725, 1e-05
        %v796 = vadd.f32 %v732, 1e-05
        %v797 = vadd.f32 %v739, 1e-05
        %v798 = vadd.f32 %v746, 1e-05
        %v799 = vadd.f32 %v753, 1e-05
        %v800 = vadd.f32 %v760, 1e-05
        %v801 = vadd.f32 %v767, 1e-05
        %v802 = vadd.f32 %v774, 1e-05
        %v803 = vadd.f32 %v781, 1e-05
        %v804 = vadd.f32 %v788, 1e-05
        %v805 = vrcp.pop %v789
        %v806 = vrcp.pop %v790
        %v807 = vrcp.pop %v791
        %v808 = vrcp.pop %v792
        %v809 = vrcp.pop %v793
        %v810 = vrcp.pop %v794
        %v811 = vrcp.pop %v795
        %v812 = vrcp.pop %v796
        %v813 = vrcp.pop %v797
        %v814 = vrcp.pop %v798
        %v815 = vrcp.pop %v799
        %v816 = vrcp.pop %v800
        %v817 = vrcp.pop %v801
        %v818 = vrcp.pop %v802
        %v819 = vrcp.pop %v803
        %v820 = vrcp.pop %v804
        %v821 = vmul.f32 %v548, %v805
        %v822 = vmul.f32 %v549, %v805
        %v823 = vmul.f32 %v550, %v806
        %v824 = vmul.f32 %v551, %v806
        %v825 = vmul.f32 %v552, %v807
        %v826 = vmul.f32 %v553, %v807
        %v827 = vmul.f32 %v554, %v808
        %v828 = vmul.f32 %v555, %v808
        %v829 = vmul.f32 %v556, %v809
        %v830 = vmul.f32 %v557, %v809
        %v831 = vmul.f32 %v558, %v810
        %v832 = vmul.f32 %v559, %v810
        %v833 = vmul.f32 %v560, %v811
        %v834 = vmul.f32 %v561, %v811
        %v835 = vmul.f32 %v562, %v812
        %v836 = vmul.f32 %v563, %v812
        %v837 = vmul.f32 %v564, %v813
        %v838 = vmul.f32 %v565, %v813
        %v839 = vmul.f32 %v566, %v814
        %v840 = vmul.f32 %v567, %v814
        %v841 = vmul.f32 %v568, %v815
        %v842 = vmul.f32 %v569, %v815
        %v843 = vmul.f32 %v570, %v816
        %v844 = vmul.f32 %v571, %v816
        %v845 = vmul.f32 %v572, %v817
        %v846 = vmul.f32 %v573, %v817
        %v847 = vmul.f32 %v574, %v818
        %v848 = vmul.f32 %v575, %v818
        %v849 = vmul.f32 %v576, %v819
        %v850 = vmul.f32 %v577, %v819
        %v851 = vmul.f32 %v578, %v820
        %v852 = vmul.f32 %v579, %v820
        %v853 = vld [vmem:[#allocation5] sm:$0xff]
        %v854 = vld [vmem:[#allocation5 + $0x8] sm:$0xff]
        %v855 = vld [vmem:[#allocation5 + $0x10] sm:$0xff]
        %v856 = vld [vmem:[#allocation5 + $0x18] sm:$0xff]
        %v857 = vld [vmem:[#allocation5 + $0x20] sm:$0xff]
        %v858 = vld [vmem:[#allocation5 + $0x28] sm:$0xff]
        %v859 = vld [vmem:[#allocation5 + $0x30] sm:$0xff]
        %v860 = vld [vmem:[#allocation5 + $0x38] sm:$0xff]
        %v861 = vld [vmem:[#allocation5 + $0x40] sm:$0xff]
        %v862 = vld [vmem:[#allocation5 + $0x48] sm:$0xff]
        %v863 = vld [vmem:[#allocation5 + $0x50] sm:$0xff]
        %v864 = vld [vmem:[#allocation5 + $0x58] sm:$0xff]
        %v865 = vld [vmem:[#allocation5 + $0x60] sm:$0xff]
        %v866 = vld [vmem:[#allocation5 + $0x68] sm:$0xff]
        %v867 = vld [vmem:[#allocation5 + $0x70] sm:$0xff]
        %v868 = vld [vmem:[#allocation5 + $0x78] sm:$0xff]
        %v869 = vld [vmem:[#allocation5 + $0x80] sm:$0xff]
        %v870 = vld [vmem:[#allocation5 + $0x88] sm:$0xff]
        %v871 = vld [vmem:[#allocation5 + $0x90] sm:$0xff]
        %v872 = vld [vmem:[#allocation5 + $0x98] sm:$0xff]
        %v873 = vld [vmem:[#allocation5 + $0xa0] sm:$0xff]
        %v874 = vld [vmem:[#allocation5 + $0xa8] sm:$0xff]
        %v875 = vld [vmem:[#allocation5 + $0xb0] sm:$0xff]
        %v876 = vld [vmem:[#allocation5 + $0xb8] sm:$0xff]
        %v877 = vld [vmem:[#allocation5 + $0xc0] sm:$0xff]
        %v878 = vld [vmem:[#allocation5 + $0xc8] sm:$0xff]
        %v879 = vld [vmem:[#allocation5 + $0xd0] sm:$0xff]
        %v880 = vld [vmem:[#allocation5 + $0xd8] sm:$0xff]
        %v881 = vld [vmem:[#allocation5 + $0xe0] sm:$0xff]
        %v882 = vld [vmem:[#allocation5 + $0xe8] sm:$0xff]
        %v883 = vld [vmem:[#allocation5 + $0xf0] sm:$0xff]
        %v884 = vld [vmem:[#allocation5 + $0xf8] sm:$0xff]
        %v885 = vld [vmem:[%s2] sm:$0x1]
        %v887 = vlaneseq
        %v888 = vshrl.u32 %v887, 7
        %v889 = vsub.s32 0, %v888
        %v890 = vrot.slane %v885, %v889
        %892 = vmatprep.subr.mxu0 0.0
        %893 = vmatpush1.msra.mxu0 %v868
        %894 = vmatprep.subr.mxu0 0.0
        %895 = vmatpush1.msra.mxu0 %v867
        %896 = vmatprep.subr.mxu0 0.0
        %897 = vmatpush1.msra.mxu0 %v866
        %898 = vmatprep.subr.mxu0 0.0
        %899 = vmatpush1.msra.mxu0 %v865
        %900 = vmatprep.subr.mxu0 0.0
        %901 = vmatpush1.msra.mxu0 %v864
        %902 = vmatprep.subr.mxu0 0.0
        %903 = vmatpush1.msra.mxu0 %v863
        %904 = vmatprep.subr.mxu0 0.0
        %905 = vmatpush1.msra.mxu0 %v862
        %906 = vmatprep.subr.mxu0 0.0
        %907 = vmatpush1.msra.mxu0 %v861
        %908 = vmatprep.subr.mxu0 0.0
        %909 = vmatpush1.msra.mxu0 %v860
        %910 = vmatprep.subr.mxu0 0.0
        %911 = vmatpush1.msra.mxu0 %v859
        %912 = vmatprep.subr.mxu0 0.0
        %913 = vmatpush1.msra.mxu0 %v858
        %914 = vmatprep.subr.mxu0 0.0
        %915 = vmatpush1.msra.mxu0 %v857
        %916 = vmatprep.subr.mxu0 0.0
        %917 = vmatpush1.msra.mxu0 %v856
        %918 = vmatprep.subr.mxu0 0.0
        %919 = vmatpush1.msra.mxu0 %v855
        %920 = vmatprep.subr.mxu0 0.0
        %921 = vmatpush1.msra.mxu0 %v854
        %922 = vmatprep.subr.mxu0 0.0
        %923 = vmatpush1.msra.mxu0 %v853
        %924 = vmatprep.subr.mxu0 0.0
        %925 = vmatpush2.msra.mxu0 %v884
        %926 = vmatprep.subr.mxu0 0.0
        %927 = vmatpush2.msra.mxu0 %v883
        %928 = vmatprep.subr.mxu0 0.0
        %929 = vmatpush2.msra.mxu0 %v882
        %930 = vmatprep.subr.mxu0 0.0
        %931 = vmatpush2.msra.mxu0 %v881
        %932 = vmatprep.subr.mxu0 0.0
        %933 = vmatpush2.msra.mxu0 %v880
        %934 = vmatprep.subr.mxu0 0.0
        %935 = vmatpush2.msra.mxu0 %v879
        %936 = vmatprep.subr.mxu0 0.0
        %937 = vmatpush2.msra.mxu0 %v878
        %938 = vmatprep.subr.mxu0 0.0
        %939 = vmatpush2.msra.mxu0 %v877
        %940 = vmatprep.subr.mxu0 0.0
        %941 = vmatpush2.msra.mxu0 %v876
        %942 = vmatprep.subr.mxu0 0.0
        %943 = vmatpush2.msra.mxu0 %v875
        %944 = vmatprep.subr.mxu0 0.0
        %945 = vmatpush2.msra.mxu0 %v874
        %946 = vmatprep.subr.mxu0 0.0
        %947 = vmatpush2.msra.mxu0 %v873
        %948 = vmatprep.subr.mxu0 0.0
        %949 = vmatpush2.msra.mxu0 %v872
        %950 = vmatprep.subr.mxu0 0.0
        %951 = vmatpush2.msra.mxu0 %v871
        %952 = vmatprep.subr.mxu0 0.0
        %953 = vmatpush2.msra.mxu0 %v870
        %954 = vmatprep.subr.mxu0 0.0
        %955 = vmatpush2.msra.mxu0 %v869
        %956 = vmatprep.mubr.f32.mxu0 %v822
        %957 = vmatmul.mubr.f32.gmra.mxu0 %v821
        %v958 = vpop.f32.mrf.mxu0
        %v959 = vadd.f32 %v890, %v958
        %v960 = vpop.f32.mrf.mxu0
        %961 = vmatprep.mubr.f32.mxu0 %v824
        %962 = vmatmul.mubr.f32.gmra.mxu0 %v823
        %v963 = vpop.f32.mrf.mxu0
        %v964 = vadd.f32 %v890, %v963
        %v965 = vpop.f32.mrf.mxu0
        %966 = vmatprep.mubr.f32.mxu0 %v826
        %967 = vmatmul.mubr.f32.gmra.mxu0 %v825
        %v968 = vpop.f32.mrf.mxu0
        %v969 = vadd.f32 %v890, %v968
        %v970 = vpop.f32.mrf.mxu0
        %971 = vmatprep.mubr.f32.mxu0 %v828
        %972 = vmatmul.mubr.f32.gmra.mxu0 %v827
        %v973 = vpop.f32.mrf.mxu0
        %v974 = vadd.f32 %v890, %v973
        %v975 = vpop.f32.mrf.mxu0
        %976 = vmatprep.mubr.f32.mxu0 %v830
        %977 = vmatmul.mubr.f32.gmra.mxu0 %v829
        %v978 = vpop.f32.mrf.mxu0
        %v979 = vadd.f32 %v890, %v978
        %v980 = vpop.f32.mrf.mxu0
        %981 = vmatprep.mubr.f32.mxu0 %v832
        %982 = vmatmul.mubr.f32.gmra.mxu0 %v831
        %v983 = vpop.f32.mrf.mxu0
        %v984 = vadd.f32 %v890, %v983
        %v985 = vpop.f32.mrf.mxu0
        %986 = vmatprep.mubr.f32.mxu0 %v834
        %987 = vmatmul.mubr.f32.gmra.mxu0 %v833
        %v988 = vpop.f32.mrf.mxu0
        %v989 = vadd.f32 %v890, %v988
        %v990 = vpop.f32.mrf.mxu0
        %991 = vmatprep.mubr.f32.mxu0 %v836
        %992 = vmatmul.mubr.f32.gmra.mxu0 %v835
        %v993 = vpop.f32.mrf.mxu0
        %v994 = vadd.f32 %v890, %v993
        %v995 = vpop.f32.mrf.mxu0
        %996 = vmatprep.mubr.f32.mxu0 %v838
        %997 = vmatmul.mubr.f32.gmra.mxu0 %v837
        %v998 = vpop.f32.mrf.mxu0
        %v999 = vadd.f32 %v890, %v998
        %v1000 = vpop.f32.mrf.mxu0
        %1001 = vmatprep.mubr.f32.mxu0 %v840
        %1002 = vmatmul.mubr.f32.gmra.mxu0 %v839
        %v1003 = vpop.f32.mrf.mxu0
        %v1004 = vadd.f32 %v890, %v1003
        %v1005 = vpop.f32.mrf.mxu0
        %1006 = vmatprep.mubr.f32.mxu0 %v842
        %1007 = vmatmul.mubr.f32.gmra.mxu0 %v841
        %v1008 = vpop.f32.mrf.mxu0
        %v1009 = vadd.f32 %v890, %v1008
        %v1010 = vpop.f32.mrf.mxu0
        %1011 = vmatprep.mubr.f32.mxu0 %v844
        %1012 = vmatmul.mubr.f32.gmra.mxu0 %v843
        %v1013 = vpop.f32.mrf.mxu0
        %v1014 = vadd.f32 %v890, %v1013
        %v1015 = vpop.f32.mrf.mxu0
        %1016 = vmatprep.mubr.f32.mxu0 %v846
        %1017 = vmatmul.mubr.f32.gmra.mxu0 %v845
        %v1018 = vpop.f32.mrf.mxu0
        %v1019 = vadd.f32 %v890, %v1018
        %v1020 = vpop.f32.mrf.mxu0
        %1021 = vmatprep.mubr.f32.mxu0 %v848
        %1022 = vmatmul.mubr.f32.gmra.mxu0 %v847
        %v1023 = vpop.f32.mrf.mxu0
        %v1024 = vadd.f32 %v890, %v1023
        %v1025 = vpop.f32.mrf.mxu0
        %1026 = vmatprep.mubr.f32.mxu0 %v850
        %1027 = vmatmul.mubr.f32.gmra.mxu0 %v849
        %v1028 = vpop.f32.mrf.mxu0
        %v1029 = vadd.f32 %v890, %v1028
        %v1030 = vpop.f32.mrf.mxu0
        %1031 = vmatprep.mubr.f32.mxu0 %v852
        %1032 = vmatmul.mubr.f32.gmra.mxu0 %v851
        %v1033 = vpop.f32.mrf.mxu0
        %v1034 = vadd.f32 %v890, %v1033
        %v1035 = vpop.f32.mrf.mxu0
        %1036 = vdwg.mxu0
        %v1037 = vmax.f32 %v959, 0.0
        %v1038 = vmax.f32 %v964, 0.0
        %v1039 = vmax.f32 %v969, 0.0
        %v1040 = vmax.f32 %v974, 0.0
        %v1041 = vmax.f32 %v979, 0.0
        %v1042 = vmax.f32 %v984, 0.0
        %v1043 = vmax.f32 %v989, 0.0
        %v1044 = vmax.f32 %v994, 0.0
        %v1045 = vmax.f32 %v999, 0.0
        %v1046 = vmax.f32 %v1004, 0.0
        %v1047 = vmax.f32 %v1009, 0.0
        %v1048 = vmax.f32 %v1014, 0.0
        %v1049 = vmax.f32 %v1019, 0.0
        %v1050 = vmax.f32 %v1024, 0.0
        %v1051 = vmax.f32 %v1029, 0.0
        %v1052 = vmax.f32 %v1034, 0.0
        %v1053 = vld [vmem:[#allocation7] sm:$0xff]
        %v1054 = vld [vmem:[#allocation7 + $0x8] sm:$0xff]
        %v1055 = vld [vmem:[#allocation7 + $0x10] sm:$0xff]
        %v1056 = vld [vmem:[#allocation7 + $0x18] sm:$0xff]
        %v1057 = vld [vmem:[#allocation7 + $0x20] sm:$0xff]
        %v1058 = vld [vmem:[#allocation7 + $0x28] sm:$0xff]
        %v1059 = vld [vmem:[#allocation7 + $0x30] sm:$0xff]
        %v1060 = vld [vmem:[#allocation7 + $0x38] sm:$0xff]
        %v1061 = vld [vmem:[#allocation7 + $0x40] sm:$0xff]
        %v1062 = vld [vmem:[#allocation7 + $0x48] sm:$0xff]
        %v1063 = vld [vmem:[#allocation7 + $0x50] sm:$0xff]
        %v1064 = vld [vmem:[#allocation7 + $0x58] sm:$0xff]
        %v1065 = vld [vmem:[#allocation7 + $0x60] sm:$0xff]
        %v1066 = vld [vmem:[#allocation7 + $0x68] sm:$0xff]
        %v1067 = vld [vmem:[#allocation7 + $0x70] sm:$0xff]
        %v1068 = vld [vmem:[#allocation7 + $0x78] sm:$0xff]
        %v1069 = vld [vmem:[%s4] sm:$0x1]
        %v1071 = vlaneseq
        %v1072 = vshrl.u32 %v1071, 7
        %v1073 = vsub.s32 0, %v1072
        %v1074 = vrot.slane %v1069, %v1073
        %1076 = vmatprep.subr.mxu0 0.0
        %1077 = vmatpush1.msra.mxu0 %v1068
        %1078 = vmatprep.subr.mxu0 0.0
        %1079 = vmatpush1.msra.mxu0 %v1067
        %1080 = vmatprep.subr.mxu0 0.0
        %1081 = vmatpush1.msra.mxu0 %v1066
        %1082 = vmatprep.subr.mxu0 0.0
        %1083 = vmatpush1.msra.mxu0 %v1065
        %1084 = vmatprep.subr.mxu0 0.0
        %1085 = vmatpush1.msra.mxu0 %v1064
        %1086 = vmatprep.subr.mxu0 0.0
        %1087 = vmatpush1.msra.mxu0 %v1063
        %1088 = vmatprep.subr.mxu0 0.0
        %1089 = vmatpush1.msra.mxu0 %v1062
        %1090 = vmatprep.subr.mxu0 0.0
        %1091 = vmatpush1.msra.mxu0 %v1061
        %1092 = vmatprep.subr.mxu0 0.0
        %1093 = vmatpush1.msra.mxu0 %v1060
        %1094 = vmatprep.subr.mxu0 0.0
        %1095 = vmatpush1.msra.mxu0 %v1059
        %1096 = vmatprep.subr.mxu0 0.0
        %1097 = vmatpush1.msra.mxu0 %v1058
        %1098 = vmatprep.subr.mxu0 0.0
        %1099 = vmatpush1.msra.mxu0 %v1057
        %1100 = vmatprep.subr.mxu0 0.0
        %1101 = vmatpush1.msra.mxu0 %v1056
        %1102 = vmatprep.subr.mxu0 0.0
        %1103 = vmatpush1.msra.mxu0 %v1055
        %1104 = vmatprep.subr.mxu0 0.0
        %1105 = vmatpush1.msra.mxu0 %v1054
        %1106 = vmatprep.subr.mxu0 0.0
        %1107 = vmatpush1.msra.mxu0 %v1053
        %1108 = vmatprep.subr.mxu0 0.0
        %1109 = vmatpush2.msra.mxu0 0.0
        %1110 = vmatprep.subr.mxu0 0.0
        %1111 = vmatpush2.msra.mxu0 0.0
        %1112 = vmatprep.subr.mxu0 0.0
        %1113 = vmatpush2.msra.mxu0 0.0
        %1114 = vmatprep.subr.mxu0 0.0
        %1115 = vmatpush2.msra.mxu0 0.0
        %1116 = vmatprep.subr.mxu0 0.0
        %1117 = vmatpush2.msra.mxu0 0.0
        %1118 = vmatprep.subr.mxu0 0.0
        %1119 = vmatpush2.msra.mxu0 0.0
        %1120 = vmatprep.subr.mxu0 0.0
        %1121 = vmatpush2.msra.mxu0 0.0
        %1122 = vmatprep.subr.mxu0 0.0
        %1123 = vmatpush2.msra.mxu0 0.0
        %1124 = vmatprep.subr.mxu0 0.0
        %1125 = vmatpush2.msra.mxu0 0.0
        %1126 = vmatprep.subr.mxu0 0.0
        %1127 = vmatpush2.msra.mxu0 0.0
        %1128 = vmatprep.subr.mxu0 0.0
        %1129 = vmatpush2.msra.mxu0 0.0
        %1130 = vmatprep.subr.mxu0 0.0
        %1131 = vmatpush2.msra.mxu0 0.0
        %1132 = vmatprep.subr.mxu0 0.0
        %1133 = vmatpush2.msra.mxu0 0.0
        %1134 = vmatprep.subr.mxu0 0.0
        %1135 = vmatpush2.msra.mxu0 0.0
        %1136 = vmatprep.subr.mxu0 0.0
        %1137 = vmatpush2.msra.mxu0 0.0
        %1138 = vmatprep.subr.mxu0 0.0
        %1139 = vmatpush2.msra.mxu0 0.0
        %1140 = vmatprep.mubr.f32.mxu0 0.0
        %1141 = vmatmul.mubr.f32.gmra.mxu0 %v1037
        %v1142 = vpop.f32.mrf.mxu0
        %v1143 = vadd.f32 %v1074, %v1142
        %v1144 = vpop.f32.mrf.mxu0
        %1145 = vmatprep.mubr.f32.mxu0 0.0
        %1146 = vmatmul.mubr.f32.gmra.mxu0 %v1038
        %v1147 = vpop.f32.mrf.mxu0
        %v1148 = vadd.f32 %v1074, %v1147
        %v1149 = vpop.f32.mrf.mxu0
        %1150 = vmatprep.mubr.f32.mxu0 0.0
        %1151 = vmatmul.mubr.f32.gmra.mxu0 %v1039
        %v1152 = vpop.f32.mrf.mxu0
        %v1153 = vadd.f32 %v1074, %v1152
        %v1154 = vpop.f32.mrf.mxu0
        %1155 = vmatprep.mubr.f32.mxu0 0.0
        %1156 = vmatmul.mubr.f32.gmra.mxu0 %v1040
        %v1157 = vpop.f32.mrf.mxu0
        %v1158 = vadd.f32 %v1074, %v1157
        %v1159 = vpop.f32.mrf.mxu0
        %1160 = vmatprep.mubr.f32.mxu0 0.0
        %1161 = vmatmul.mubr.f32.gmra.mxu0 %v1041
        %v1162 = vpop.f32.mrf.mxu0
        %v1163 = vadd.f32 %v1074, %v1162
        %v1164 = vpop.f32.mrf.mxu0
        %1165 = vmatprep.mubr.f32.mxu0 0.0
        %1166 = vmatmul.mubr.f32.gmra.mxu0 %v1042
        %v1167 = vpop.f32.mrf.mxu0
        %v1168 = vadd.f32 %v1074, %v1167
        %v1169 = vpop.f32.mrf.mxu0
        %1170 = vmatprep.mubr.f32.mxu0 0.0
        %1171 = vmatmul.mubr.f32.gmra.mxu0 %v1043
        %v1172 = vpop.f32.mrf.mxu0
        %v1173 = vadd.f32 %v1074, %v1172
        %v1174 = vpop.f32.mrf.mxu0
        %1175 = vmatprep.mubr.f32.mxu0 0.0
        %1176 = vmatmul.mubr.f32.gmra.mxu0 %v1044
        %v1177 = vpop.f32.mrf.mxu0
        %v1178 = vadd.f32 %v1074, %v1177
        %v1179 = vpop.f32.mrf.mxu0
        %1180 = vmatprep.mubr.f32.mxu0 0.0
        %1181 = vmatmul.mubr.f32.gmra.mxu0 %v1045
        %v1182 = vpop.f32.mrf.mxu0
        %v1183 = vadd.f32 %v1074, %v1182
        %v1184 = vpop.f32.mrf.mxu0
        %1185 = vmatprep.mubr.f32.mxu0 0.0
        %1186 = vmatmul.mubr.f32.gmra.mxu0 %v1046
        %v1187 = vpop.f32.mrf.mxu0
        %v1188 = vadd.f32 %v1074, %v1187
        %v1189 = vpop.f32.mrf.mxu0
        %1190 = vmatprep.mubr.f32.mxu0 0.0
        %1191 = vmatmul.mubr.f32.gmra.mxu0 %v1047
        %v1192 = vpop.f32.mrf.mxu0
        %v1193 = vadd.f32 %v1074, %v1192
        %v1194 = vpop.f32.mrf.mxu0
        %1195 = vmatprep.mubr.f32.mxu0 0.0
        %1196 = vmatmul.mubr.f32.gmra.mxu0 %v1048
        %v1197 = vpop.f32.mrf.mxu0
        %v1198 = vadd.f32 %v1074, %v1197
        %v1199 = vpop.f32.mrf.mxu0
        %1200 = vmatprep.mubr.f32.mxu0 0.0
        %1201 = vmatmul.mubr.f32.gmra.mxu0 %v1049
        %v1202 = vpop.f32.mrf.mxu0
        %v1203 = vadd.f32 %v1074, %v1202
        %v1204 = vpop.f32.mrf.mxu0
        %1205 = vmatprep.mubr.f32.mxu0 0.0
        %1206 = vmatmul.mubr.f32.gmra.mxu0 %v1050
        %v1207 = vpop.f32.mrf.mxu0
        %v1208 = vadd.f32 %v1074, %v1207
        %v1209 = vpop.f32.mrf.mxu0
        %1210 = vmatprep.mubr.f32.mxu0 0.0
        %1211 = vmatmul.mubr.f32.gmra.mxu0 %v1051
        %v1212 = vpop.f32.mrf.mxu0
        %v1213 = vadd.f32 %v1074, %v1212
        %v1214 = vpop.f32.mrf.mxu0
        %1215 = vmatprep.mubr.f32.mxu0 0.0
        %1216 = vmatmul.mubr.f32.gmra.mxu0 %v1052
        %v1217 = vpop.f32.mrf.mxu0
        %v1218 = vadd.f32 %v1074, %v1217
        %v1219 = vpop.f32.mrf.mxu0
        %1220 = vdwg.mxu0
        %1221 = vst [vmem:[%s440] sm:$0xff] %v1143
        %1222 = vst [vmem:[%s440 + $0x8] sm:$0xff] %v1148
        %1223 = vst [vmem:[%s440 + $0x10] sm:$0xff] %v1153
        %1224 = vst [vmem:[%s440 + $0x18] sm:$0xff] %v1158
        %1225 = vst [vmem:[%s440 + $0x20] sm:$0xff] %v1163
        %1226 = vst [vmem:[%s440 + $0x28] sm:$0xff] %v1168
        %1227 = vst [vmem:[%s440 + $0x30] sm:$0xff] %v1173
        %1228 = vst [vmem:[%s440 + $0x38] sm:$0xff] %v1178
        %1229 = vst [vmem:[%s440 + $0x40] sm:$0xff] %v1183
        %1230 = vst [vmem:[%s440 + $0x48] sm:$0xff] %v1188
        %1231 = vst [vmem:[%s440 + $0x50] sm:$0xff] %v1193
        %1232 = vst [vmem:[%s440 + $0x58] sm:$0xff] %v1198
        %1233 = vst [vmem:[%s440 + $0x60] sm:$0xff] %v1203
        %1234 = vst [vmem:[%s440 + $0x68] sm:$0xff] %v1208
        %1235 = vst [vmem:[%s440 + $0x70] sm:$0xff] %v1213
        %1236 = vst [vmem:[%s440 + $0x78] sm:$0xff] %v1218
        %v1237 = vld [vmem:[#allocation8] sm:$0xff]
        %v1238 = vld [vmem:[#allocation8 + $0x8] sm:$0xff]
        %v1239 = vld [vmem:[#allocation8 + $0x10] sm:$0xff]
        %v1240 = vld [vmem:[#allocation8 + $0x18] sm:$0xff]
        %v1241 = vld [vmem:[#allocation8 + $0x20] sm:$0xff]
        %v1242 = vld [vmem:[#allocation8 + $0x28] sm:$0xff]
        %v1243 = vld [vmem:[#allocation8 + $0x30] sm:$0xff]
        %v1244 = vld [vmem:[#allocation8 + $0x38] sm:$0xff]
        %v1245 = vld [vmem:[#allocation8 + $0x40] sm:$0xff]
        %v1246 = vld [vmem:[#allocation8 + $0x48] sm:$0xff]
        %v1247 = vld [vmem:[#allocation8 + $0x50] sm:$0xff]
        %v1248 = vld [vmem:[#allocation8 + $0x58] sm:$0xff]
        %v1249 = vld [vmem:[#allocation8 + $0x60] sm:$0xff]
        %v1250 = vld [vmem:[#allocation8 + $0x68] sm:$0xff]
        %v1251 = vld [vmem:[#allocation8 + $0x70] sm:$0xff]
        %v1252 = vld [vmem:[#allocation8 + $0x78] sm:$0xff]
        %v1253 = vld [vmem:[%s6] sm:$0x1]
        %v1255 = vlaneseq
        %v1256 = vshrl.u32 %v1255, 7
        %v1257 = vsub.s32 0, %v1256
        %v1258 = vrot.slane %v1253, %v1257
        %1260 = vmatprep.subr.mxu0 0.0
        %1261 = vmatpush1.msra.mxu0 %v1252
        %1262 = vmatprep.subr.mxu0 0.0
        %1263 = vmatpush1.msra.mxu0 %v1251
        %1264 = vmatprep.subr.mxu0 0.0
        %1265 = vmatpush1.msra.mxu0 %v1250
        %1266 = vmatprep.subr.mxu0 0.0
        %1267 = vmatpush1.msra.mxu0 %v1249
        %1268 = vmatprep.subr.mxu0 0.0
        %1269 = vmatpush1.msra.mxu0 %v1248
        %1270 = vmatprep.subr.mxu0 0.0
        %1271 = vmatpush1.msra.mxu0 %v1247
        %1272 = vmatprep.subr.mxu0 0.0
        %1273 = vmatpush1.msra.mxu0 %v1246
        %1274 = vmatprep.subr.mxu0 0.0
        %1275 = vmatpush1.msra.mxu0 %v1245
        %1276 = vmatprep.subr.mxu0 0.0
        %1277 = vmatpush1.msra.mxu0 %v1244
        %1278 = vmatprep.subr.mxu0 0.0
        %1279 = vmatpush1.msra.mxu0 %v1243
        %1280 = vmatprep.subr.mxu0 0.0
        %1281 = vmatpush1.msra.mxu0 %v1242
        %1282 = vmatprep.subr.mxu0 0.0
        %1283 = vmatpush1.msra.mxu0 %v1241
        %1284 = vmatprep.subr.mxu0 0.0
        %1285 = vmatpush1.msra.mxu0 %v1240
        %1286 = vmatprep.subr.mxu0 0.0
        %1287 = vmatpush1.msra.mxu0 %v1239
        %1288 = vmatprep.subr.mxu0 0.0
        %1289 = vmatpush1.msra.mxu0 %v1238
        %1290 = vmatprep.subr.mxu0 0.0
        %1291 = vmatpush1.msra.mxu0 %v1237
        %1292 = vmatprep.subr.mxu0 0.0
        %1293 = vmatpush2.msra.mxu0 0.0
        %1294 = vmatprep.subr.mxu0 0.0
        %1295 = vmatpush2.msra.mxu0 0.0
        %1296 = vmatprep.subr.mxu0 0.0
        %1297 = vmatpush2.msra.mxu0 0.0
        %1298 = vmatprep.subr.mxu0 0.0
        %1299 = vmatpush2.msra.mxu0 0.0
        %1300 = vmatprep.subr.mxu0 0.0
        %1301 = vmatpush2.msra.mxu0 0.0
        %1302 = vmatprep.subr.mxu0 0.0
        %1303 = vmatpush2.msra.mxu0 0.0
        %1304 = vmatprep.subr.mxu0 0.0
        %1305 = vmatpush2.msra.mxu0 0.0
        %1306 = vmatprep.subr.mxu0 0.0
        %1307 = vmatpush2.msra.mxu0 0.0
        %1308 = vmatprep.subr.mxu0 0.0
        %1309 = vmatpush2.msra.mxu0 0.0
        %1310 = vmatprep.subr.mxu0 0.0
        %1311 = vmatpush2.msra.mxu0 0.0
        %1312 = vmatprep.subr.mxu0 0.0
        %1313 = vmatpush2.msra.mxu0 0.0
        %1314 = vmatprep.subr.mxu0 0.0
        %1315 = vmatpush2.msra.mxu0 0.0
        %1316 = vmatprep.subr.mxu0 0.0
        %1317 = vmatpush2.msra.mxu0 0.0
        %1318 = vmatprep.subr.mxu0 0.0
        %1319 = vmatpush2.msra.mxu0 0.0
        %1320 = vmatprep.subr.mxu0 0.0
        %1321 = vmatpush2.msra.mxu0 0.0
        %1322 = vmatprep.subr.mxu0 0.0
        %1323 = vmatpush2.msra.mxu0 0.0
        %1324 = vmatprep.mubr.f32.mxu0 0.0
        %1325 = vmatmul.mubr.f32.gmra.mxu0 %v1143
        %v1326 = vpop.f32.mrf.mxu0
        %v1327 = vadd.f32 %v1258, %v1326
        %v1328 = vpop.f32.mrf.mxu0
        %1329 = vmatprep.mubr.f32.mxu0 0.0
        %1330 = vmatmul.mubr.f32.gmra.mxu0 %v1148
        %v1331 = vpop.f32.mrf.mxu0
        %v1332 = vadd.f32 %v1258, %v1331
        %v1333 = vpop.f32.mrf.mxu0
        %1334 = vmatprep.mubr.f32.mxu0 0.0
        %1335 = vmatmul.mubr.f32.gmra.mxu0 %v1153
        %v1336 = vpop.f32.mrf.mxu0
        %v1337 = vadd.f32 %v1258, %v1336
        %v1338 = vpop.f32.mrf.mxu0
        %1339 = vmatprep.mubr.f32.mxu0 0.0
        %1340 = vmatmul.mubr.f32.gmra.mxu0 %v1158
        %v1341 = vpop.f32.mrf.mxu0
        %v1342 = vadd.f32 %v1258, %v1341
        %v1343 = vpop.f32.mrf.mxu0
        %1344 = vmatprep.mubr.f32.mxu0 0.0
        %1345 = vmatmul.mubr.f32.gmra.mxu0 %v1163
        %v1346 = vpop.f32.mrf.mxu0
        %v1347 = vadd.f32 %v1258, %v1346
        %v1348 = vpop.f32.mrf.mxu0
        %1349 = vmatprep.mubr.f32.mxu0 0.0
        %1350 = vmatmul.mubr.f32.gmra.mxu0 %v1168
        %v1351 = vpop.f32.mrf.mxu0
        %v1352 = vadd.f32 %v1258, %v1351
        %v1353 = vpop.f32.mrf.mxu0
        %1354 = vmatprep.mubr.f32.mxu0 0.0
        %1355 = vmatmul.mubr.f32.gmra.mxu0 %v1173
        %v1356 = vpop.f32.mrf.mxu0
        %v1357 = vadd.f32 %v1258, %v1356
        %v1358 = vpop.f32.mrf.mxu0
        %1359 = vmatprep.mubr.f32.mxu0 0.0
        %1360 = vmatmul.mubr.f32.gmra.mxu0 %v1178
        %v1361 = vpop.f32.mrf.mxu0
        %v1362 = vadd.f32 %v1258, %v1361
        %v1363 = vpop.f32.mrf.mxu0
        %1364 = vmatprep.mubr.f32.mxu0 0.0
        %1365 = vmatmul.mubr.f32.gmra.mxu0 %v1183
        %v1366 = vpop.f32.mrf.mxu0
        %v1367 = vadd.f32 %v1258, %v1366
        %v1368 = vpop.f32.mrf.mxu0
        %1369 = vmatprep.mubr.f32.mxu0 0.0
        %1370 = vmatmul.mubr.f32.gmra.mxu0 %v1188
        %v1371 = vpop.f32.mrf.mxu0
        %v1372 = vadd.f32 %v1258, %v1371
        %v1373 = vpop.f32.mrf.mxu0
        %1374 = vmatprep.mubr.f32.mxu0 0.0
        %1375 = vmatmul.mubr.f32.gmra.mxu0 %v1193
        %v1376 = vpop.f32.mrf.mxu0
        %v1377 = vadd.f32 %v1258, %v1376
        %v1378 = vpop.f32.mrf.mxu0
        %1379 = vmatprep.mubr.f32.mxu0 0.0
        %1380 = vmatmul.mubr.f32.gmra.mxu0 %v1198
        %v1381 = vpop.f32.mrf.mxu0
        %v1382 = vadd.f32 %v1258, %v1381
        %v1383 = vpop.f32.mrf.mxu0
        %1384 = vmatprep.mubr.f32.mxu0 0.0
        %1385 = vmatmul.mubr.f32.gmra.mxu0 %v1203
        %v1386 = vpop.f32.mrf.mxu0
        %v1387 = vadd.f32 %v1258, %v1386
        %v1388 = vpop.f32.mrf.mxu0
        %1389 = vmatprep.mubr.f32.mxu0 0.0
        %1390 = vmatmul.mubr.f32.gmra.mxu0 %v1208
        %v1391 = vpop.f32.mrf.mxu0
        %v1392 = vadd.f32 %v1258, %v1391
        %v1393 = vpop.f32.mrf.mxu0
        %1394 = vmatprep.mubr.f32.mxu0 0.0
        %1395 = vmatmul.mubr.f32.gmra.mxu0 %v1213
        %v1396 = vpop.f32.mrf.mxu0
        %v1397 = vadd.f32 %v1258, %v1396
        %v1398 = vpop.f32.mrf.mxu0
        %1399 = vmatprep.mubr.f32.mxu0 0.0
        %1400 = vmatmul.mubr.f32.gmra.mxu0 %v1218
        %v1401 = vpop.f32.mrf.mxu0
        %v1402 = vadd.f32 %v1258, %v1401
        %v1403 = vpop.f32.mrf.mxu0
        %1404 = vdwg.mxu0
        %v1405 = vmax.f32 %v1327, 0.0
        %v1406 = vmax.f32 %v1332, 0.0
        %v1407 = vmax.f32 %v1337, 0.0
        %v1408 = vmax.f32 %v1342, 0.0
        %v1409 = vmax.f32 %v1347, 0.0
        %v1410 = vmax.f32 %v1352, 0.0
        %v1411 = vmax.f32 %v1357, 0.0
        %v1412 = vmax.f32 %v1362, 0.0
        %v1413 = vmax.f32 %v1367, 0.0
        %v1414 = vmax.f32 %v1372, 0.0
        %v1415 = vmax.f32 %v1377, 0.0
        %v1416 = vmax.f32 %v1382, 0.0
        %v1417 = vmax.f32 %v1387, 0.0
        %v1418 = vmax.f32 %v1392, 0.0
        %v1419 = vmax.f32 %v1397, 0.0
        %v1420 = vmax.f32 %v1402, 0.0
        %v1421 = vld [vmem:[#allocation10] sm:$0xff]
        %v1422 = vld [vmem:[#allocation10 + $0x8] sm:$0xff]
        %v1423 = vld [vmem:[#allocation10 + $0x10] sm:$0xff]
        %v1424 = vld [vmem:[#allocation10 + $0x18] sm:$0xff]
        %v1425 = vld [vmem:[#allocation10 + $0x20] sm:$0xff]
        %v1426 = vld [vmem:[#allocation10 + $0x28] sm:$0xff]
        %v1427 = vld [vmem:[#allocation10 + $0x30] sm:$0xff]
        %v1428 = vld [vmem:[#allocation10 + $0x38] sm:$0xff]
        %v1429 = vld [vmem:[#allocation10 + $0x40] sm:$0xff]
        %v1430 = vld [vmem:[#allocation10 + $0x48] sm:$0xff]
        %v1431 = vld [vmem:[#allocation10 + $0x50] sm:$0xff]
        %v1432 = vld [vmem:[#allocation10 + $0x58] sm:$0xff]
        %v1433 = vld [vmem:[#allocation10 + $0x60] sm:$0xff]
        %v1434 = vld [vmem:[#allocation10 + $0x68] sm:$0xff]
        %v1435 = vld [vmem:[#allocation10 + $0x70] sm:$0xff]
        %v1436 = vld [vmem:[#allocation10 + $0x78] sm:$0xff]
        %v1437 = vld [vmem:[#allocation10 + $0x80] sm:$0xff]
        %v1438 = vld [vmem:[#allocation10 + $0x88] sm:$0xff]
        %v1439 = vld [vmem:[#allocation10 + $0x90] sm:$0xff]
        %v1440 = vld [vmem:[#allocation10 + $0x98] sm:$0xff]
        %v1441 = vld [vmem:[#allocation10 + $0xa0] sm:$0xff]
        %v1442 = vld [vmem:[#allocation10 + $0xa8] sm:$0xff]
        %v1443 = vld [vmem:[#allocation10 + $0xb0] sm:$0xff]
        %v1444 = vld [vmem:[#allocation10 + $0xb8] sm:$0xff]
        %v1445 = vld [vmem:[#allocation10 + $0xc0] sm:$0xff]
        %v1446 = vld [vmem:[#allocation10 + $0xc8] sm:$0xff]
        %v1447 = vld [vmem:[#allocation10 + $0xd0] sm:$0xff]
        %v1448 = vld [vmem:[#allocation10 + $0xd8] sm:$0xff]
        %v1449 = vld [vmem:[#allocation10 + $0xe0] sm:$0xff]
        %v1450 = vld [vmem:[#allocation10 + $0xe8] sm:$0xff]
        %v1451 = vld [vmem:[#allocation10 + $0xf0] sm:$0xff]
        %v1452 = vld [vmem:[#allocation10 + $0xf8] sm:$0xff]
        %v1453 = vld [vmem:[%s8] sm:$0x3]
        %v1455 = vlaneseq
        %v1456 = vshrl.u32 %v1455, 7
        %v1457 = vsub.s32 0, %v1456
        %v1458 = vrot.slane %v1453, %v1457
        %v1459 = vlaneseq
        %v1460 = vshrl.u32 %v1459, 7
        %v1461 = vsub.s32 1, %v1460
        %v1462 = vrot.slane %v1453, %v1461
        %1465 = vmatprep.subr.mxu0 %v1452
        %1466 = vmatpush1.msra.mxu0 %v1451
        %1467 = vmatprep.subr.mxu0 %v1450
        %1468 = vmatpush1.msra.mxu0 %v1449
        %1469 = vmatprep.subr.mxu0 %v1448
        %1470 = vmatpush1.msra.mxu0 %v1447
        %1471 = vmatprep.subr.mxu0 %v1446
        %1472 = vmatpush1.msra.mxu0 %v1445
        %1473 = vmatprep.subr.mxu0 %v1444
        %1474 = vmatpush1.msra.mxu0 %v1443
        %1475 = vmatprep.subr.mxu0 %v1442
        %1476 = vmatpush1.msra.mxu0 %v1441
        %1477 = vmatprep.subr.mxu0 %v1440
        %1478 = vmatpush1.msra.mxu0 %v1439
        %1479 = vmatprep.subr.mxu0 %v1438
        %1480 = vmatpush1.msra.mxu0 %v1437
        %1481 = vmatprep.subr.mxu0 %v1436
        %1482 = vmatpush1.msra.mxu0 %v1435
        %1483 = vmatprep.subr.mxu0 %v1434
        %1484 = vmatpush1.msra.mxu0 %v1433
        %1485 = vmatprep.subr.mxu0 %v1432
        %1486 = vmatpush1.msra.mxu0 %v1431
        %1487 = vmatprep.subr.mxu0 %v1430
        %1488 = vmatpush1.msra.mxu0 %v1429
        %1489 = vmatprep.subr.mxu0 %v1428
        %1490 = vmatpush1.msra.mxu0 %v1427
        %1491 = vmatprep.subr.mxu0 %v1426
        %1492 = vmatpush1.msra.mxu0 %v1425
        %1493 = vmatprep.subr.mxu0 %v1424
        %1494 = vmatpush1.msra.mxu0 %v1423
        %1495 = vmatprep.subr.mxu0 %v1422
        %1496 = vmatpush1.msra.mxu0 %v1421
        %1497 = vmatprep.subr.mxu0 0.0
        %1498 = vmatpush2.msra.mxu0 0.0
        %1499 = vmatprep.subr.mxu0 0.0
        %1500 = vmatpush2.msra.mxu0 0.0
        %1501 = vmatprep.subr.mxu0 0.0
        %1502 = vmatpush2.msra.mxu0 0.0
        %1503 = vmatprep.subr.mxu0 0.0
        %1504 = vmatpush2.msra.mxu0 0.0
        %1505 = vmatprep.subr.mxu0 0.0
        %1506 = vmatpush2.msra.mxu0 0.0
        %1507 = vmatprep.subr.mxu0 0.0
        %1508 = vmatpush2.msra.mxu0 0.0
        %1509 = vmatprep.subr.mxu0 0.0
        %1510 = vmatpush2.msra.mxu0 0.0
        %1511 = vmatprep.subr.mxu0 0.0
        %1512 = vmatpush2.msra.mxu0 0.0
        %1513 = vmatprep.subr.mxu0 0.0
        %1514 = vmatpush2.msra.mxu0 0.0
        %1515 = vmatprep.subr.mxu0 0.0
        %1516 = vmatpush2.msra.mxu0 0.0
        %1517 = vmatprep.subr.mxu0 0.0
        %1518 = vmatpush2.msra.mxu0 0.0
        %1519 = vmatprep.subr.mxu0 0.0
        %1520 = vmatpush2.msra.mxu0 0.0
        %1521 = vmatprep.subr.mxu0 0.0
        %1522 = vmatpush2.msra.mxu0 0.0
        %1523 = vmatprep.subr.mxu0 0.0
        %1524 = vmatpush2.msra.mxu0 0.0
        %1525 = vmatprep.subr.mxu0 0.0
        %1526 = vmatpush2.msra.mxu0 0.0
        %1527 = vmatprep.subr.mxu0 0.0
        %1528 = vmatpush2.msra.mxu0 0.0
        %1529 = vmatprep.mubr.f32.mxu0 0.0
        %1530 = vmatmul.mubr.f32.gmra.mxu0 %v1405
        %v1531 = vpop.f32.mrf.mxu0
        %v1532 = vadd.f32 %v1458, %v1531
        %v1533 = vpop.f32.mrf.mxu0
        %v1534 = vadd.f32 %v1462, %v1533
        %1535 = vmatprep.mubr.f32.mxu0 0.0
        %1536 = vmatmul.mubr.f32.gmra.mxu0 %v1406
        %v1537 = vpop.f32.mrf.mxu0
        %v1538 = vadd.f32 %v1458, %v1537
        %v1539 = vpop.f32.mrf.mxu0
        %v1540 = vadd.f32 %v1462, %v1539
        %1541 = vmatprep.mubr.f32.mxu0 0.0
        %1542 = vmatmul.mubr.f32.gmra.mxu0 %v1407
        %v1543 = vpop.f32.mrf.mxu0
        %v1544 = vadd.f32 %v1458, %v1543
        %v1545 = vpop.f32.mrf.mxu0
        %v1546 = vadd.f32 %v1462, %v1545
        %1547 = vmatprep.mubr.f32.mxu0 0.0
        %1548 = vmatmul.mubr.f32.gmra.mxu0 %v1408
        %v1549 = vpop.f32.mrf.mxu0
        %v1550 = vadd.f32 %v1458, %v1549
        %v1551 = vpop.f32.mrf.mxu0
        %v1552 = vadd.f32 %v1462, %v1551
        %1553 = vmatprep.mubr.f32.mxu0 0.0
        %1554 = vmatmul.mubr.f32.gmra.mxu0 %v1409
        %v1555 = vpop.f32.mrf.mxu0
        %v1556 = vadd.f32 %v1458, %v1555
        %v1557 = vpop.f32.mrf.mxu0
        %v1558 = vadd.f32 %v1462, %v1557
        %1559 = vmatprep.mubr.f32.mxu0 0.0
        %1560 = vmatmul.mubr.f32.gmra.mxu0 %v1410
        %v1561 = vpop.f32.mrf.mxu0
        %v1562 = vadd.f32 %v1458, %v1561
        %v1563 = vpop.f32.mrf.mxu0
        %v1564 = vadd.f32 %v1462, %v1563
        %1565 = vmatprep.mubr.f32.mxu0 0.0
        %1566 = vmatmul.mubr.f32.gmra.mxu0 %v1411
        %v1567 = vpop.f32.mrf.mxu0
        %v1568 = vadd.f32 %v1458, %v1567
        %v1569 = vpop.f32.mrf.mxu0
        %v1570 = vadd.f32 %v1462, %v1569
        %1571 = vmatprep.mubr.f32.mxu0 0.0
        %1572 = vmatmul.mubr.f32.gmra.mxu0 %v1412
        %v1573 = vpop.f32.mrf.mxu0
        %v1574 = vadd.f32 %v1458, %v1573
        %v1575 = vpop.f32.mrf.mxu0
        %v1576 = vadd.f32 %v1462, %v1575
        %1577 = vmatprep.mubr.f32.mxu0 0.0
        %1578 = vmatmul.mubr.f32.gmra.mxu0 %v1413
        %v1579 = vpop.f32.mrf.mxu0
        %v1580 = vadd.f32 %v1458, %v1579
        %v1581 = vpop.f32.mrf.mxu0
        %v1582 = vadd.f32 %v1462, %v1581
        %1583 = vmatprep.mubr.f32.mxu0 0.0
        %1584 = vmatmul.mubr.f32.gmra.mxu0 %v1414
        %v1585 = vpop.f32.mrf.mxu0
        %v1586 = vadd.f32 %v1458, %v1585
        %v1587 = vpop.f32.mrf.mxu0
        %v1588 = vadd.f32 %v1462, %v1587
        %1589 = vmatprep.mubr.f32.mxu0 0.0
        %1590 = vmatmul.mubr.f32.gmra.mxu0 %v1415
        %v1591 = vpop.f32.mrf.mxu0
        %v1592 = vadd.f32 %v1458, %v1591
        %v1593 = vpop.f32.mrf.mxu0
        %v1594 = vadd.f32 %v1462, %v1593
        %1595 = vmatprep.mubr.f32.mxu0 0.0
        %1596 = vmatmul.mubr.f32.gmra.mxu0 %v1416
        %v1597 = vpop.f32.mrf.mxu0
        %v1598 = vadd.f32 %v1458, %v1597
        %v1599 = vpop.f32.mrf.mxu0
        %v1600 = vadd.f32 %v1462, %v1599
        %1601 = vmatprep.mubr.f32.mxu0 0.0
        %1602 = vmatmul.mubr.f32.gmra.mxu0 %v1417
        %v1603 = vpop.f32.mrf.mxu0
        %v1604 = vadd.f32 %v1458, %v1603
        %v1605 = vpop.f32.mrf.mxu0
        %v1606 = vadd.f32 %v1462, %v1605
        %1607 = vmatprep.mubr.f32.mxu0 0.0
        %1608 = vmatmul.mubr.f32.gmra.mxu0 %v1418
        %v1609 = vpop.f32.mrf.mxu0
        %v1610 = vadd.f32 %v1458, %v1609
        %v1611 = vpop.f32.mrf.mxu0
        %v1612 = vadd.f32 %v1462, %v1611
        %1613 = vmatprep.mubr.f32.mxu0 0.0
        %1614 = vmatmul.mubr.f32.gmra.mxu0 %v1419
        %v1615 = vpop.f32.mrf.mxu0
        %v1616 = vadd.f32 %v1458, %v1615
        %v1617 = vpop.f32.mrf.mxu0
        %v1618 = vadd.f32 %v1462, %v1617
        %1619 = vmatprep.mubr.f32.mxu0 0.0
        %1620 = vmatmul.mubr.f32.gmra.mxu0 %v1420
        %v1621 = vpop.f32.mrf.mxu0
        %v1622 = vadd.f32 %v1458, %v1621
        %v1623 = vpop.f32.mrf.mxu0
        %v1624 = vadd.f32 %v1462, %v1623
        %1625 = vdwg.mxu0
        %v1626 = vmul.f32 %v1532, %v683
        %v1627 = vmul.f32 %v1534, %v683
        %v1628 = vmul.f32 %v1538, %v690
        %v1629 = vmul.f32 %v1540, %v690
        %v1630 = vmul.f32 %v1544, %v697
        %v1631 = vmul.f32 %v1546, %v697
        %v1632 = vmul.f32 %v1550, %v704
        %v1633 = vmul.f32 %v1552, %v704
        %v1634 = vmul.f32 %v1556, %v711
        %v1635 = vmul.f32 %v1558, %v711
        %v1636 = vmul.f32 %v1562, %v718
        %v1637 = vmul.f32 %v1564, %v718
        %v1638 = vmul.f32 %v1568, %v725
        %v1639 = vmul.f32 %v1570, %v725
        %v1640 = vmul.f32 %v1574, %v732
        %v1641 = vmul.f32 %v1576, %v732
        %v1642 = vmul.f32 %v1580, %v739
        %v1643 = vmul.f32 %v1582, %v739
        %v1644 = vmul.f32 %v1586, %v746
        %v1645 = vmul.f32 %v1588, %v746
        %v1646 = vmul.f32 %v1592, %v753
        %v1647 = vmul.f32 %v1594, %v753
        %v1648 = vmul.f32 %v1598, %v760
        %v1649 = vmul.f32 %v1600, %v760
        %v1650 = vmul.f32 %v1604, %v767
        %v1651 = vmul.f32 %v1606, %v767
        %v1652 = vmul.f32 %v1610, %v774
        %v1653 = vmul.f32 %v1612, %v774
        %v1654 = vmul.f32 %v1616, %v781
        %v1655 = vmul.f32 %v1618, %v781
        %v1656 = vmul.f32 %v1622, %v788
        %v1657 = vmul.f32 %v1624, %v788
        %v1658 = vadd.f32 %v1626, %v532
        %v1659 = vadd.f32 %v1627, %v532
        %v1660 = vadd.f32 %v1628, %v533
        %v1661 = vadd.f32 %v1629, %v533
        %v1662 = vadd.f32 %v1630, %v534
        %v1663 = vadd.f32 %v1631, %v534
        %v1664 = vadd.f32 %v1632, %v535
        %v1665 = vadd.f32 %v1633, %v535
        %v1666 = vadd.f32 %v1634, %v536
        %v1667 = vadd.f32 %v1635, %v536
        %v1668 = vadd.f32 %v1636, %v537
        %v1669 = vadd.f32 %v1637, %v537
        %v1670 = vadd.f32 %v1638, %v538
        %v1671 = vadd.f32 %v1639, %v538
        %v1672 = vadd.f32 %v1640, %v539
        %v1673 = vadd.f32 %v1641, %v539
        %v1674 = vadd.f32 %v1642, %v540
        %v1675 = vadd.f32 %v1643, %v540
        %v1676 = vadd.f32 %v1644, %v541
        %v1677 = vadd.f32 %v1645, %v541
        %v1678 = vadd.f32 %v1646, %v542
        %v1679 = vadd.f32 %v1647, %v542
        %v1680 = vadd.f32 %v1648, %v543
        %v1681 = vadd.f32 %v1649, %v543
        %v1682 = vadd.f32 %v1650, %v544
        %v1683 = vadd.f32 %v1651, %v544
        %v1684 = vadd.f32 %v1652, %v545
        %v1685 = vadd.f32 %v1653, %v545
        %v1686 = vadd.f32 %v1654, %v546
        %v1687 = vadd.f32 %v1655, %v546
        %v1688 = vadd.f32 %v1656, %v547
        %v1689 = vadd.f32 %v1657, %v547
        %1690 = vst [vmem:[%s447] sm:$0xff] %v1658
        %1691 = vst [vmem:[%s447 + $0x8] sm:$0xff] %v1659
        %1692 = vst [vmem:[%s447 + $0x10] sm:$0xff] %v1660
        %1693 = vst [vmem:[%s447 + $0x18] sm:$0xff] %v1661
        %1694 = vst [vmem:[%s447 + $0x20] sm:$0xff] %v1662
        %1695 = vst [vmem:[%s447 + $0x28] sm:$0xff] %v1663
        %1696 = vst [vmem:[%s447 + $0x30] sm:$0xff] %v1664
        %1697 = vst [vmem:[%s447 + $0x38] sm:$0xff] %v1665
        %1698 = vst [vmem:[%s447 + $0x40] sm:$0xff] %v1666
        %1699 = vst [vmem:[%s447 + $0x48] sm:$0xff] %v1667
        %1700 = vst [vmem:[%s447 + $0x50] sm:$0xff] %v1668
        %1701 = vst [vmem:[%s447 + $0x58] sm:$0xff] %v1669
        %1702 = vst [vmem:[%s447 + $0x60] sm:$0xff] %v1670
        %1703 = vst [vmem:[%s447 + $0x68] sm:$0xff] %v1671
        %1704 = vst [vmem:[%s447 + $0x70] sm:$0xff] %v1672
        %1705 = vst [vmem:[%s447 + $0x78] sm:$0xff] %v1673
        %1706 = vst [vmem:[%s447 + $0x80] sm:$0xff] %v1674
        %1707 = vst [vmem:[%s447 + $0x88] sm:$0xff] %v1675
        %1708 = vst [vmem:[%s447 + $0x90] sm:$0xff] %v1676
        %1709 = vst [vmem:[%s447 + $0x98] sm:$0xff] %v1677
        %1710 = vst [vmem:[%s447 + $0xa0] sm:$0xff] %v1678
        %1711 = vst [vmem:[%s447 + $0xa8] sm:$0xff] %v1679
        %1712 = vst [vmem:[%s447 + $0xb0] sm:$0xff] %v1680
        %1713 = vst [vmem:[%s447 + $0xb8] sm:$0xff] %v1681
        %1714 = vst [vmem:[%s447 + $0xc0] sm:$0xff] %v1682
        %1715 = vst [vmem:[%s447 + $0xc8] sm:$0xff] %v1683
        %1716 = vst [vmem:[%s447 + $0xd0] sm:$0xff] %v1684
        %1717 = vst [vmem:[%s447 + $0xd8] sm:$0xff] %v1685
        %1718 = vst [vmem:[%s447 + $0xe0] sm:$0xff] %v1686
        %1719 = vst [vmem:[%s447 + $0xe8] sm:$0xff] %v1687
        %1720 = vst [vmem:[%s447 + $0xf0] sm:$0xff] %v1688
        %1721 = vst [vmem:[%s447 + $0xf8] sm:$0xff] %v1689
        %s1722 = sand.u32 %s235, 1
        %s1723 = scalar_lea.sflag [#allocation4], %s1722
        %s1724 = sand.u32 %s235, 1
        %s1725 = smul.addr %s1724, 128
        %s1726 = scalar_lea.vmem [#allocation11], %s1725
        %s1727 = sand.u32 %s261, 1
        %s1728 = scalar_lea.sflag [#allocation13], %s1727
        %s1729 = sand.u32 %s261, 1
        %s1730 = smul.addr %s1729, 256
        %s1731 = scalar_lea.vmem [#allocation12], %s1730
        // Predicated region
        $region77: #{tpu_custom_call.1} parent=55 // pred_check
          %p1732 = pneg %p245
        $region78: #{tpu_custom_call.1} parent=55 // pred_check_branch
          %1734 = sbr.rel (%p1732) target = $region80
        $region79: #{tpu_custom_call.1} parent=55 // pred_region
          %s1735 = smul.u32 16, %s33
          %s1737 = ssub.s32 2048, 2048
          %1738 = vsyncadd %s1723, %s1737
          %s1739 = smul.addr %s1735, 128
          %s1740 = scalar_lea.hbm %s9, %s1739
          %s1741 = sshll.u32 %s1726, 4
          %s1742 = int_to_ptr.vmem [resolvable:$true] %s1741
          %1747 = dma.vmem_to_hbm [thread:$0]  %s1742, 2048, %s1740, %s1723, 128, 128, 8
        $region80: #{tpu_custom_call.1} parent=55 // pred_fallthru
          _
        // Predicated region
        $region81: #{tpu_custom_call.1} parent=55 // pred_check
          %p1748 = pneg %p271
        $region82: #{tpu_custom_call.1} parent=55 // pred_check_branch
          %1750 = sbr.rel (%p1748) target = $region84
        $region83: #{tpu_custom_call.1} parent=55 // pred_region
          %s1751 = smul.u32 16, %s33
          %s1753 = ssub.s32 4096, 4096
          %1754 = vsyncadd %s1728, %s1753
          %s1755 = smul.addr %s1751, 2
          %s1756 = smul.addr %s1755, 128
          %s1757 = scalar_lea.hbm %s10, %s1756
          %s1758 = sshll.u32 %s1731, 4
          %s1759 = int_to_ptr.vmem [resolvable:$true] %s1758
          %1764 = dma.vmem_to_hbm [thread:$0]  %s1759, 4096, %s1757, %s1728, 256, 256, 16
        $region84: #{tpu_custom_call.1} parent=55 // pred_fallthru
          _
      $region56: #{tpu_custom_call.1} parent=5 // pred_fallthru
        _
      %p1765 = scmp.le.s32.totalorder 2, %s28
      // Predicated region
      $region85: #{tpu_custom_call.1} parent=5 // pred_check
        %p1766 = pneg %p1765
      $region86: #{tpu_custom_call.1} parent=5 // pred_check_branch
        %1768 = sbr.rel (%p1766) target = $region88
      $region87: #{tpu_custom_call.1} parent=5 // pred_region
        %s1769 = ssub.s32 %s28, 2
        // Predicated region
        $region89: #{tpu_custom_call.1} parent=87 // pred_check
          %p1770 = pneg %p251
        $region90: #{tpu_custom_call.1} parent=87 // pred_check_branch
          %1772 = sbr.rel (%p1770) target = $region92
        $region91: #{tpu_custom_call.1} parent=87 // pred_region
          %s1773 = sand.u32 %s236, 1
          %s1774 = scalar_lea.sflag [#allocation4], %s1773
          %s1775 = sand.u32 %s236, 1
          %s1776 = smul.addr %s1775, 128
          %s1777 = scalar_lea.vmem [#allocation11], %s1776
          %1778 = dma.done %s1774, 2048
        $region92: #{tpu_custom_call.1} parent=87 // pred_fallthru
          _
        // Predicated region
        $region93: #{tpu_custom_call.1} parent=87 // pred_check
          %p1779 = pneg %p277
        $region94: #{tpu_custom_call.1} parent=87 // pred_check_branch
          %1781 = sbr.rel (%p1779) target = $region96
        $region95: #{tpu_custom_call.1} parent=87 // pred_region
          %s1782 = sand.u32 %s262, 1
          %s1783 = scalar_lea.sflag [#allocation13], %s1782
          %s1784 = sand.u32 %s262, 1
          %s1785 = smul.addr %s1784, 256
          %s1786 = scalar_lea.vmem [#allocation12], %s1785
          %1787 = dma.done %s1783, 4096
        $region96: #{tpu_custom_call.1} parent=87 // pred_fallthru
          _
      $region88: #{tpu_custom_call.1} parent=5 // pred_fallthru
        _
    $region6: #{tpu_custom_call.1} parent=1 // loop_footer
      %s32 = sadd.s32 1, %s28
    $region7: #{tpu_custom_call.1} parent=1 // loop_footer_branch
      %27 = sbr.rel target = $region3
    $region8: #{tpu_custom_call.1} parent=1 // loop_exit
      _
    %1788 = vsyncpa [#allocation3], 1
    %s1789 = scalar_lea.sflag [#allocation3], 1
    %1790 = vsyncpa %s1789, 1
    %1791 = vsyncpa [#allocation6], 1
    %1792 = vsyncpa [#allocation9], 1
    %1793 = vsyncpa [#allocation4], 1
    %s1794 = scalar_lea.sflag [#allocation4], 1
    %1795 = vsyncpa %s1794, 1
    %1796 = vsyncpa [#allocation13], 1
    %s1797 = scalar_lea.sflag [#allocation13], 1
    %1798 = vsyncpa %s1797, 1

</llo_original>
